<compile_context>
chip_gen: v7x
topology: tpu7x:2x2x1
jax: 0.10.0
libtpu: 0.0.40
codegen_flags: <defaults>
</compile_context>

<pallas_src>
import functools

import jax
import jax.numpy as jnp
from jax import lax
from jax.experimental import pallas as pl
from jax.experimental.pallas import tpu as pltpu


def _round_up(x, m):
    return (x + m - 1) // m * m


def _stats_kernel(x_ref, sums_ref, xtx_ref, *, precision):
    """Accumulate per-split column sums and X^T X directly into output refs."""
    s = pl.program_id(1)

    @pl.when(s == 0)
    def _():
        sums_ref[...] = jnp.zeros_like(sums_ref)
        xtx_ref[...] = jnp.zeros_like(xtx_ref)

    x = x_ref[...]                                    # (tile_n, D), input dtype
    ones = jnp.ones((1, x.shape[0]), dtype=x.dtype)
    # Column sums ride the otherwise-idle MXU slot; zero-padded rows add 0.
    colsum = lax.dot_general(
        ones, x, dimension_numbers=(((1,), (0,)), ((), ())),
        preferred_element_type=jnp.float32, precision=precision)
    sums_ref[...] += colsum[None, :, :]               # (1, 1, D)
    # X^T X (contract the sample axis), f32 accumulation.
    xtx = lax.dot_general(
        x, x, dimension_numbers=(((0,), (0,)), ((), ())),
        preferred_element_type=jnp.float32, precision=precision)
    xtx_ref[...] += xtx[None, :, :]                   # (1, D, D)


def _whiten_kernel(x_ref, u_ref, mu_ref, out_ref, *, precision):
    """out = x @ U_scaled - mu_w   (mean folded into the matmul)."""
    acc = lax.dot_general(
        x_ref[...], u_ref[...],
        dimension_numbers=(((1,), (0,)), ((), ())),
        preferred_element_type=jnp.float32, precision=precision)
    out_ref[...] = (acc - mu_ref[...]).astype(out_ref.dtype)


def whitening1d_svd(x, eps=1e-5, tile_n=None):
    """Pallas implementation of Whitening1dSVD.forward for 2-D input (N, D)."""
    N, D = x.shape
    dtype = x.dtype
    if N < 2:
        raise ValueError("Whitening1dSVD requires at least 2 samples (N >= 2).")

    itemsize = jnp.dtype(dtype).itemsize
    row_align = 16 if itemsize == 2 else 8
    is_f32 = jnp.dtype(dtype) == jnp.float32
    precision = lax.Precision.HIGHEST if is_f32 else lax.Precision.DEFAULT

    # Generation-aware VMEM budget: ~51 MiB on v7x (64 MiB physical),
    # ~100 MiB on v5e/v6e (128 MiB physical).
    try:
        vmem_cap = pltpu.get_tpu_info().vmem_capacity_bytes
    except Exception:
        vmem_cap = 64 * 1024 * 1024
    vmem_limit = min(int(vmem_cap) * 4 // 5, 100 * 1024 * 1024)
    budget = int(vmem_limit * 0.7)          # headroom for compiler scratch

    # Row tile: target 512 (f32) / 1024 (bf16), bounded by the VMEM budget
    # (double-buffered x tile + resident D^2 f32 accumulator) and by N.
    if tile_n is None:
        target = 1024 if itemsize == 2 else 512
        fixed = 2 * D * D * 4 + 4 * D * 4
        avail = budget - fixed
        cap = avail // (2 * D * itemsize) if avail > 0 else row_align
        tile_n = max(min(target, cap), row_align)
    tile_n = _round_up(min(int(tile_n), _round_up(N, row_align)), row_align)

    n_tiles = -(-N // tile_n)
    n_splits = 2 if n_tiles >= 2 else 1      # per-TC partials (v7x megacore)
    steps = -(-n_tiles // n_splits)
    n_pad = tile_n * steps * n_splits
    x_p = jnp.pad(x, ((0, n_pad - N), (0, 0))) if n_pad != N else x

    # ---- Kernel 1: partial column sums + partial X^T X ------------------
    stats_cost = pl.CostEstimate(
        flops=2 * n_pad * D * (D + 1),
        transcendentals=0,
        bytes_accessed=n_pad * D * itemsize + n_splits * (D * D + D) * 4,
    )
    partial_sums, partial_xtx = pl.pallas_call(
        functools.partial(_stats_kernel, precision=precision),
        out_shape=(
            jax.ShapeDtypeStruct((n_splits, 1, D), jnp.float32),
            jax.ShapeDtypeStruct((n_splits, D, D), jnp.float32),
        ),
        grid=(n_splits, steps),
        in_specs=[pl.BlockSpec((tile_n, D), lambda c, s: (c * steps + s, 0))],
        out_specs=(
            pl.BlockSpec((1, 1, D), lambda c, s: (c, 0, 0)),
            pl.BlockSpec((1, D, D), lambda c, s: (c, 0, 0)),
        ),
        compiler_params=pltpu.CompilerParams(
            dimension_semantics=("parallel", "arbitrary"),
            vmem_limit_bytes=vmem_limit),
        cost_estimate=stats_cost,
    )(x_p)

    # ---- Host finalize (tiny DxD ops) + SVD in plain JAX -----------------
    # TODO(synk): SVD has no Pallas equivalent; torch upcasts cov with .float()
    # (f32) before torch.linalg.svd, and TPU has no f64, so jnp.linalg.svd f32.
    sums = jnp.sum(partial_sums, axis=0)                 # (1, D) f32
    xtx = jnp.sum(partial_xtx, axis=0)                   # (D, D) f32
    n = jnp.float32(N)
    mean = sums / n                                      # (1, D) f32
    cov = (xtx - n * (mean.T @ mean)) / jnp.float32(N - 1)
    cov = (cov + cov.T) * jnp.float32(0.5)
    cov = cov + jnp.eye(D, dtype=jnp.float32) * jnp.float32(eps)  # eps*I (as torch)
    U, S, _ = jnp.linalg.svd(cov, full_matrices=False)
    # Fold diag(1/sqrt(S + eps)) into U (eps applied again here, as in torch),
    # cast to the input dtype (torch does the whitening matmul in x's dtype),
    # then fold the mean in:  (x - mean) @ U_s == x @ U_s - (mean @ U_s).
    u_scaled = (U * (1.0 / jnp.sqrt(S + jnp.float32(eps)))[None, :]).astype(dtype)
    mu_w = mean @ u_scaled.astype(jnp.float32)           # (1, D) f32

    # Column tile for U / the output so a full (D, D) U double-buffered never
    # has to fit v7x's 64 MiB VMEM at large D; lane width stays a 128 multiple.
    def _fits(td):
        return (2 * tile_n * D * itemsize + 2 * D * td * itemsize
                + 2 * tile_n * td * itemsize + 2 * td * 4) <= budget

    tile_d = D
    if not _fits(tile_d) and D % 128 == 0:
        for c in range(D // 128, 0, -1):
            td = c * 128
            if D % td == 0 and _fits(td):
                tile_d = td
                break
        else:
            tile_d = 128

    # ---- Kernel 2: fused whitening matmul, parallel over rows & columns --
    n_rows_out = tile_n * n_tiles
    whiten_cost = pl.CostEstimate(
        flops=2 * n_rows_out * D * D,
        transcendentals=0,
        bytes_accessed=(2 * n_rows_out * D * itemsize
                        + D * D * itemsize + D * 4),
    )
    whitened = pl.pallas_call(
        functools.partial(_whiten_kernel, precision=precision),
        out_shape=jax.ShapeDtypeStruct((n_rows_out, D), dtype),
        grid=(n_tiles, D // tile_d),
        in_specs=[
            pl.BlockSpec((tile_n, D), lambda i, j: (i, 0)),
            pl.BlockSpec((D, tile_d), lambda i, j: (0, j)),
            pl.BlockSpec((1, tile_d), lambda i, j: (0, j)),
        ],
        out_specs=pl.BlockSpec((tile_n, tile_d), lambda i, j: (i, j)),
        compiler_params=pltpu.CompilerParams(
            dimension_semantics=("parallel", "parallel"),
            vmem_limit_bytes=vmem_limit),
        cost_estimate=whiten_cost,
    )(x_p, u_scaled, mu_w)

    return whitened[:N] if n_rows_out != N else whitened


if __name__ == "__main__":
    key = jax.random.PRNGKey(0)
    # N not a multiple of the tile (exercises padding + the 2-way stats split)
    # and D lane-aligned (128).
    N, D = 300, 128
    x = jax.random.normal(key, (N, D), dtype=jnp.float32) * 2.0 + 0.5

    w = whitening1d_svd(x, eps=1e-5, tile_n=128)
    w = jax.block_until_ready(w)

    assert w.shape == (N, D) and w.dtype == jnp.float32
    assert bool(jnp.all(jnp.isfinite(w)))

    # Sanity: whitened features should have ~identity covariance.
    cov_w = jnp.matmul(w.T, w, precision=lax.Precision.HIGHEST) / (N - 1)
    err = float(jnp.max(jnp.abs(cov_w - jnp.eye(D, dtype=jnp.float32))))
    assert err < 1e-2, f"whitened covariance deviates from identity: {err}"

    print("KERNEL_OK")
</pallas_src>

<mosaic_0001>
module attributes {stable_mosaic.version = 11 : i64} {
  func.func @_stats_kernel(%arg0: i32, %arg1: i32, %arg2: memref<128x128xf32, #tpu.memory_space<vmem>>, %arg3: memref<1x1x128xf32, #tpu.memory_space<vmem>>, %arg4: memref<1x128x128xf32, #tpu.memory_space<vmem>>) attributes {dimension_semantics = [#tpu.dimension_semantics<parallel>, #tpu.dimension_semantics<arbitrary>], iteration_bounds = array<i64: 2, 2>, scalar_prefetch = 0 : i64, scratch_operands = 0 : i64, tpu.core_type = #tpu.core_type<tc>, window_params = [{transform_indices = @transform_0, window_bounds = array<i64: 128, 128>}, {transform_indices = @transform_1, window_bounds = array<i64: 1, 1, 128>}, {transform_indices = @transform_2, window_bounds = array<i64: 1, 128, 128>}]} {
    %c0_i32 = arith.constant 0 : i32
    %0 = arith.cmpi eq, %arg1, %c0_i32 : i32
    %1 = arith.extui %0 : i1 to i32
    %c0_i32_0 = arith.constant 0 : i32
    %2 = arith.cmpi ne, %1, %c0_i32_0 : i32
    scf.if %2 {
      %cst_16 = arith.constant 0.000000e+00 : f32
      %15 = vector.broadcast %cst_16 : f32 to vector<1x1x128xf32>
      %c0_17 = arith.constant 0 : index
      %c0_18 = arith.constant 0 : index
      %c0_19 = arith.constant 0 : index
      %16 = vector.load %arg3[%c0_17, %c0_18, %c0_19] : memref<1x1x128xf32, #tpu.memory_space<vmem>>, vector<1x1x128xf32>
      tpu.vector_store %arg3[%c0_17, %c0_18, %c0_19], %15 {strides = array<i32>} : memref<1x1x128xf32, #tpu.memory_space<vmem>>, vector<1x1x128xf32>,
      %cst_20 = arith.constant 0.000000e+00 : f32
      %17 = vector.broadcast %cst_20 : f32 to vector<1x128x128xf32>
      %c0_21 = arith.constant 0 : index
      %c0_22 = arith.constant 0 : index
      %c0_23 = arith.constant 0 : index
      %18 = vector.load %arg4[%c0_21, %c0_22, %c0_23] : memref<1x128x128xf32, #tpu.memory_space<vmem>>, vector<1x128x128xf32>
      tpu.vector_store %arg4[%c0_21, %c0_22, %c0_23], %17 {strides = array<i32>} : memref<1x128x128xf32, #tpu.memory_space<vmem>>, vector<1x128x128xf32>,
    } else {
    }
    %c0 = arith.constant 0 : index
    %c0_1 = arith.constant 0 : index
    %3 = vector.load %arg2[%c0, %c0_1] : memref<128x128xf32, #tpu.memory_space<vmem>>, vector<128x128xf32>
    %cst = arith.constant 1.000000e+00 : f32
    %4 = vector.broadcast %cst : f32 to vector<1x128xf32>
    %cst_2 = arith.constant dense<0.000000e+00> : vector<1x128xf32>
    %5 = tpu.matmul %4, %3, %cst_2 {dimension_numbers = #tpu.dot_dimension_numbers<[1], [0], [0], [1], [0, 0, 1, 1], [], []>, precision = #tpu.contract_precision<fp32>} : vector<1x128xf32>, vector<128x128xf32>, vector<1x128xf32> -> vector<1x128xf32>
    %c0_3 = arith.constant 0 : index
    %c0_4 = arith.constant 0 : index
    %c0_5 = arith.constant 0 : index
    %6 = vector.load %arg3[%c0_3, %c0_4, %c0_5] : memref<1x1x128xf32, #tpu.memory_space<vmem>>, vector<1x1x128xf32>
    %7 = vector.shape_cast %5 : vector<1x128xf32> to vector<1x1x128xf32>
    %8 = arith.addf %6, %7 : vector<1x1x128xf32>
    %c0_6 = arith.constant 0 : index
    %c0_7 = arith.constant 0 : index
    %c0_8 = arith.constant 0 : index
    %9 = vector.load %arg3[%c0_6, %c0_7, %c0_8] : memref<1x1x128xf32, #tpu.memory_space<vmem>>, vector<1x1x128xf32>
    tpu.vector_store %arg3[%c0_6, %c0_7, %c0_8], %8 {strides = array<i32>} : memref<1x1x128xf32, #tpu.memory_space<vmem>>, vector<1x1x128xf32>,
    %cst_9 = arith.constant dense<0.000000e+00> : vector<128x128xf32>
    %10 = tpu.matmul %3, %3, %cst_9 {dimension_numbers = #tpu.dot_dimension_numbers<[0], [0], [1], [1], [0, 1, 1, 1], [], []>, precision = #tpu.contract_precision<fp32>} : vector<128x128xf32>, vector<128x128xf32>, vector<128x128xf32> -> vector<128x128xf32>
    %c0_10 = arith.constant 0 : index
    %c0_11 = arith.constant 0 : index
    %c0_12 = arith.constant 0 : index
    %11 = vector.load %arg4[%c0_10, %c0_11, %c0_12] : memref<1x128x128xf32, #tpu.memory_space<vmem>>, vector<1x128x128xf32>
    %12 = vector.shape_cast %10 : vector<128x128xf32> to vector<1x128x128xf32>
    %13 = arith.addf %11, %12 : vector<1x128x128xf32>
    %c0_13 = arith.constant 0 : index
    %c0_14 = arith.constant 0 : index
    %c0_15 = arith.constant 0 : index
    %14 = vector.load %arg4[%c0_13, %c0_14, %c0_15] : memref<1x128x128xf32, #tpu.memory_space<vmem>>, vector<1x128x128xf32>
    tpu.vector_store %arg4[%c0_13, %c0_14, %c0_15], %13 {strides = array<i32>} : memref<1x128x128xf32, #tpu.memory_space<vmem>>, vector<1x128x128xf32>,
    return
  }
  func.func @transform_0(%arg0: i32, %arg1: i32) -> (i32, i32) {
    %c2_i32 = arith.constant 2 : i32
    %0 = arith.muli %arg0, %c2_i32 : i32
    %1 = arith.addi %0, %arg1 : i32
    %c0_i32 = arith.constant 0 : i32
    %c0_i32_0 = arith.constant 0 : i32
    return %1, %c0_i32 : i32, i32
  }
  func.func @transform_1(%arg0: i32, %arg1: i32) -> (i32, i32, i32) {
    %c0_i32 = arith.constant 0 : i32
    %c0_i32_0 = arith.constant 0 : i32
    %c0_i32_1 = arith.constant 0 : i32
    return %arg0, %c0_i32, %c0_i32_0 : i32, i32, i32
  }
  func.func @transform_2(%arg0: i32, %arg1: i32) -> (i32, i32, i32) {
    %c0_i32 = arith.constant 0 : i32
    %c0_i32_0 = arith.constant 0 : i32
    %c0_i32_1 = arith.constant 0 : i32
    return %arg0, %c0_i32, %c0_i32_0 : i32, i32, i32
  }
}

</mosaic_0001>

<llo_original>
// kernel: tpu_custom_call.1
$region0: #{tpu_custom_call.1}
  #allocation0 [shape = 'u32[]', space=smem, size = 0x4, offset = 0x4, fixed_abs, tag = 'smem constant byte address 0x4 - core index']
  #allocation1 [shape = 'u32[144,128]{1,0:T(1,128)}', space=vmem, size = 0x12000, scoped, tag = 'internal scratch']
  %s0 = inlined_call_operand.hbm [shape: f32[512,128], index: 0, kind: input, shape index: {}]
  %s1 = inlined_call_operand.hbm [shape: f32[2,1,128], index: 1, kind: output, shape index: {0}]
  %s2 = inlined_call_operand.hbm [shape: f32[2,128,128], index: 2, kind: output, shape index: {1}]
  %3 = xla_tuple %s1, %s2
  %s4 = sld [smem:[#allocation0]]
  $region53: #{tpu_custom_call.1} parent=0
    _
  %s6 = ssub.s32 1, %s4
  %s7 = scalar_select 0, %s6, %s4
  $region1: #{tpu_custom_call.1} parent=0
    #allocation2 [shape = 'u8[131072]{0}', space=vmem, size = 0x20000, scoped, tag = 'input window, operand 0']
    #allocation3 [shape = 's32[2]{0}', space=sflag, size = 0x8, scoped, tag = 'scoped memory for tpu_custom_call.1']
    #allocation4 [shape = 's32[2]{0}', space=sflag, size = 0x8, scoped, tag = 'scoped memory for tpu_custom_call.1']
    #allocation5 [shape = 'u8[1024]{0}', space=vmem, size = 0x400, scoped, tag = 'output window, operand 0']
    #allocation6 [shape = 'u8[131072]{0}', space=vmem, size = 0x20000, scoped, tag = 'output window, operand 1']
    #allocation7 [shape = 's32[2]{0}', space=sflag, size = 0x8, scoped, tag = 'scoped memory for tpu_custom_call.1']
    %8 = vsyncpa [#allocation3], 0
    %s9 = scalar_lea.sflag [#allocation3], 1
    %10 = vsyncpa %s9, 0
    %11 = vsyncpa [#allocation4], 0
    %s12 = scalar_lea.sflag [#allocation4], 1
    %13 = vsyncpa %s12, 0
    %14 = vsyncpa [#allocation7], 0
    %s15 = scalar_lea.sflag [#allocation7], 1
    %16 = vsyncpa %s15, 0
    loop: start=0, step=1, limit=6
    $region2: #{tpu_custom_call.1} parent=1 // loop_pre_header
      _
    $region3: #{tpu_custom_call.1} parent=1 // loop_header
      %s18 = sphi 0, %s22
      %p19 = scmp.ge.s32.totalorder %s18, 6
      %s25 = sphi 0, %s37
      %s26 = sphi 0, %s33
      %s27 = sphi 0, %s25
      %s28 = sphi 0, %s26
      %s29 = sphi 0, %s27
      %s30 = sphi 0, %s28
      %s44 = sphi 0, %s46
      %s47 = sphi 0, %s44
      %s48 = sphi 0, %s47
      %s64 = sphi 0, %s48
      %s70 = sphi 0, %s72
      %s73 = sphi 0, %s70
      %s74 = sphi 0, %s73
      %s90 = sphi 0, %s74
      %s96 = sphi 0, %s98
      %s99 = sphi 0, %s96
      %s100 = sphi 0, %s99
      %s116 = sphi 0, %s100
    $region4: #{tpu_custom_call.1} parent=1 // loop_header_branch
      %21 = sbr.rel (%p19) target = $region8
    $region5: #{tpu_custom_call.1} parent=1 // loop_body
      %s23 = ssub.s32 %s18, 1
      %s24 = ssub.s32 %s18, 2
      %s31 = sadd.s32 1, %s26
      %p32 = scmp.ge.s32.totalorder %s31, 2
      %s33 = scalar_select %p32, 0, %s31
      %s34 = sadd.s32 1, %s25
      %s35 = scalar_select %p32, %s34, %s25
      %p36 = scmp.ge.s32.totalorder %s35, 2
      %s37 = scalar_select %p36, 0, %s35
      %s38 = smul.u32 %s25, 2
      %s39 = sadd.s32 %s38, %s26
      %s40 = smul.u32 %s37, 2
      %s41 = sadd.s32 %s40, %s33
      %s42 = ssub.s32 %s39, %s41
      %p43 = scmp.eq.s32.totalorder %s42, 0
      %s45 = sadd.s32 %s44, 1
      %s46 = scalar_select %p43, %s44, %s45
      %p49 = pneg %p43
      %p50 = scmp.eq.s32.totalorder %s18, 3
      %p51 = por %p49, %p50
      %p52 = scmp.ne.s32.totalorder %s44, %s47
      %p53 = scmp.eq.s32.totalorder %s18, 0
      %p54 = por %p52, %p53
      %p55 = scmp.ne.s32.totalorder %s44, %s47
      %p56 = scmp.eq.s32.totalorder %s23, 3
      %p57 = por %p55, %p56
      %p58 = scmp.ne.s32.totalorder %s47, %s48
      %p59 = scmp.eq.s32.totalorder %s23, 0
      %p60 = por %p58, %p59
      %p61 = scmp.ne.s32.totalorder %s47, %s48
      %p62 = scmp.eq.s32.totalorder %s24, 3
      %p63 = por %p61, %p62
      %p65 = scmp.ne.s32.totalorder %s48, %s64
      %p66 = scmp.eq.s32.totalorder %s24, 0
      %p67 = por %p65, %p66
      %s68 = ssub.s32 %s25, %s37
      %p69 = scmp.eq.s32.totalorder %s68, 0
      %s71 = sadd.s32 %s70, 1
      %s72 = scalar_select %p69, %s70, %s71
      %p75 = pneg %p69
      %p76 = scmp.eq.s32.totalorder %s18, 3
      %p77 = por %p75, %p76
      %p78 = scmp.ne.s32.totalorder %s70, %s73
      %p79 = scmp.eq.s32.totalorder %s18, 0
      %p80 = por %p78, %p79
      %p81 = scmp.ne.s32.totalorder %s70, %s73
      %p82 = scmp.eq.s32.totalorder %s23, 3
      %p83 = por %p81, %p82
      %p84 = scmp.ne.s32.totalorder %s73, %s74
      %p85 = scmp.eq.s32.totalorder %s23, 0
      %p86 = por %p84, %p85
      %p87 = scmp.ne.s32.totalorder %s73, %s74
      %p88 = scmp.eq.s32.totalorder %s24, 3
      %p89 = por %p87, %p88
      %p91 = scmp.ne.s32.totalorder %s74, %s90
      %p92 = scmp.eq.s32.totalorder %s24, 0
      %p93 = por %p91, %p92
      %s94 = ssub.s32 %s25, %s37
      %p95 = scmp.eq.s32.totalorder %s94, 0
      %s97 = sadd.s32 %s96, 1
      %s98 = scalar_select %p95, %s96, %s97
      %p101 = pneg %p95
      %p102 = scmp.eq.s32.totalorder %s18, 3
      %p103 = por %p101, %p102
      %p104 = scmp.ne.s32.totalorder %s96, %s99
      %p105 = scmp.eq.s32.totalorder %s18, 0
      %p106 = por %p104, %p105
      %p107 = scmp.ne.s32.totalorder %s96, %s99
      %p108 = scmp.eq.s32.totalorder %s23, 3
      %p109 = por %p107, %p108
      %p110 = scmp.ne.s32.totalorder %s99, %s100
      %p111 = scmp.eq.s32.totalorder %s23, 0
      %p112 = por %p110, %p111
      %p113 = scmp.ne.s32.totalorder %s99, %s100
      %p114 = scmp.eq.s32.totalorder %s24, 3
      %p115 = por %p113, %p114
      %p117 = scmp.ne.s32.totalorder %s100, %s116
      %p118 = scmp.eq.s32.totalorder %s24, 0
      %p119 = por %p117, %p118
      %p120 = scmp.le.s32.totalorder 1, %s18
      %p121 = scmp.lt.s32.totalorder %s18, 5
      %p122 = pnand %p120, %p121
      %p123 = pneg %p122
      // Predicated region
      $region9: #{tpu_custom_call.1} parent=5 // pred_check
        _
      $region10: #{tpu_custom_call.1} parent=5 // pred_check_branch
        %125 = sbr.rel (%p122) target = $region12
      $region11: #{tpu_custom_call.1} parent=5 // pred_region
        %s126 = ssub.s32 %s18, 1
      $region12: #{tpu_custom_call.1} parent=5 // pred_fallthru
        _
      %p127 = scmp.lt.s32.totalorder %s18, 4
      // Predicated region
      $region13: #{tpu_custom_call.1} parent=5 // pred_check
        %p128 = pneg %p127
      $region14: #{tpu_custom_call.1} parent=5 // pred_check_branch
        %130 = sbr.rel (%p128) target = $region16
      $region15: #{tpu_custom_call.1} parent=5 // pred_region
        // Predicated region
        $region17: #{tpu_custom_call.1} parent=15 // pred_check
          %p131 = pneg %p54
        $region18: #{tpu_custom_call.1} parent=15 // pred_check_branch
          %133 = sbr.rel (%p131) target = $region20
        $region19: #{tpu_custom_call.1} parent=15 // pred_region
          %s134 = sand.u32 %s44, 1
          %s135 = scalar_lea.sflag [#allocation3], %s134
          %s136 = sand.u32 %s44, 1
          %s137 = smul.addr %s136, 128
          %s138 = scalar_lea.vmem [#allocation2], %s137
          %s139 = smul.u32 %s25, 2
          %s140 = sadd.s32 %s139, %s26
          %s141 = smul.u32 16, %s140
          %s143 = ssub.s32 2048, 2048
          %144 = vsyncadd %s135, %s143
          %s145 = smul.addr %s141, 128
          %s146 = scalar_lea.hbm %s0, %s145
          %s147 = sshll.u32 %s138, 4
          %s148 = int_to_ptr.vmem [resolvable:$true] %s147
          %153 = dma.hbm_to_vmem [thread:$0]  %s146, 2048, %s148, %s135, 128, 128, 8
        $region20: #{tpu_custom_call.1} parent=15 // pred_fallthru
          _
      $region16: #{tpu_custom_call.1} parent=5 // pred_fallthru
        _
      %p154 = scmp.le.s32.totalorder 1, %s18
      %p155 = scmp.lt.s32.totalorder %s18, 5
      %p156 = pnand %p154, %p155
      %p157 = pneg %p156
      // Predicated region
      $region21: #{tpu_custom_call.1} parent=5 // pred_check
        _
      $region22: #{tpu_custom_call.1} parent=5 // pred_check_branch
        %159 = sbr.rel (%p156) target = $region24
      $region23: #{tpu_custom_call.1} parent=5 // pred_region
        %s160 = ssub.s32 %s18, 1
        %s161 = sand.u32 %s47, 1
        %s162 = scalar_lea.sflag [#allocation3], %s161
        %s163 = sand.u32 %s47, 1
        %s164 = smul.addr %s163, 128
        %s165 = scalar_lea.vmem [#allocation2], %s164
        // Predicated region
        $region25: #{tpu_custom_call.1} parent=23 // pred_check
          %p166 = pneg %p60
        $region26: #{tpu_custom_call.1} parent=23 // pred_check_branch
          %168 = sbr.rel (%p166) target = $region28
        $region27: #{tpu_custom_call.1} parent=23 // pred_region
          %169 = dma.done %s162, 2048
        $region28: #{tpu_custom_call.1} parent=23 // pred_fallthru
          _
        %s170 = sand.u32 %s47, 1
        %s171 = scalar_lea.sflag [#allocation3], %s170
        %s172 = sand.u32 %s47, 1
        %s173 = smul.addr %s172, 128
        %s174 = scalar_lea.vmem [#allocation2], %s173
        %p175 = pneg %p60
        %p176 = pneg %p57
        %p177 = pneg %p86
        %p178 = pneg %p83
        %s179 = sand.u32 %s73, 1
        %s180 = scalar_lea.sflag [#allocation4], %s179
        %s181 = sand.u32 %s73, 1
        %s182 = scalar_lea.vmem [#allocation5], %s181
        %p183 = pneg %p112
        %p184 = pneg %p109
        %s185 = sand.u32 %s99, 1
        %s186 = scalar_lea.sflag [#allocation7], %s185
        %s187 = sand.u32 %s99, 1
        %s188 = smul.addr %s187, 128
        %s189 = scalar_lea.vmem [#allocation6], %s188
        %s190 = smul.u32 %s27, 2
        %s191 = sadd.s32 %s190, %s28
        %s192 = smul.u32 16, %s191
        %p193 = scmp.eq.s32.totalorder %s28, 0
        // Predicated region
        $region29: #{tpu_custom_call.1} parent=23 // pred_check
          %p194 = pneg %p193
        $region30: #{tpu_custom_call.1} parent=23 // pred_check_branch
          %196 = sbr.rel (%p194) target = $region32
        $region31: #{tpu_custom_call.1} parent=23 // pred_region
          %197 = vst [vmem:[%s182] sm:$0x1] 0.0
          %198 = vst [vmem:[%s189] sm:$0xff] 0.0
          %199 = vst [vmem:[%s189 + $0x8] sm:$0xff] 0.0
          %200 = vst [vmem:[%s189 + $0x10] sm:$0xff] 0.0
          %201 = vst [vmem:[%s189 + $0x18] sm:$0xff] 0.0
          %202 = vst [vmem:[%s189 + $0x20] sm:$0xff] 0.0
          %203 = vst [vmem:[%s189 + $0x28] sm:$0xff] 0.0
          %204 = vst [vmem:[%s189 + $0x30] sm:$0xff] 0.0
          %205 = vst [vmem:[%s189 + $0x38] sm:$0xff] 0.0
          %206 = vst [vmem:[%s189 + $0x40] sm:$0xff] 0.0
          %207 = vst [vmem:[%s189 + $0x48] sm:$0xff] 0.0
          %208 = vst [vmem:[%s189 + $0x50] sm:$0xff] 0.0
          %209 = vst [vmem:[%s189 + $0x58] sm:$0xff] 0.0
          %210 = vst [vmem:[%s189 + $0x60] sm:$0xff] 0.0
          %211 = vst [vmem:[%s189 + $0x68] sm:$0xff] 0.0
          %212 = vst [vmem:[%s189 + $0x70] sm:$0xff] 0.0
          %213 = vst [vmem:[%s189 + $0x78] sm:$0xff] 0.0
        $region32: #{tpu_custom_call.1} parent=23 // pred_fallthru
          _
        %v214 = vld [vmem:[%s165] sm:$0xff]
        %v215 = vld [vmem:[%s165 + $0x8] sm:$0xff]
        %v216 = vld [vmem:[%s165 + $0x10] sm:$0xff]
        %v217 = vld [vmem:[%s165 + $0x18] sm:$0xff]
        %v218 = vld [vmem:[%s165 + $0x20] sm:$0xff]
        %v219 = vld [vmem:[%s165 + $0x28] sm:$0xff]
        %v220 = vld [vmem:[%s165 + $0x30] sm:$0xff]
        %v221 = vld [vmem:[%s165 + $0x38] sm:$0xff]
        %v222 = vld [vmem:[%s165 + $0x40] sm:$0xff]
        %v223 = vld [vmem:[%s165 + $0x48] sm:$0xff]
        %v224 = vld [vmem:[%s165 + $0x50] sm:$0xff]
        %v225 = vld [vmem:[%s165 + $0x58] sm:$0xff]
        %v226 = vld [vmem:[%s165 + $0x60] sm:$0xff]
        %v227 = vld [vmem:[%s165 + $0x68] sm:$0xff]
        %v228 = vld [vmem:[%s165 + $0x70] sm:$0xff]
        %v229 = vld [vmem:[%s165 + $0x78] sm:$0xff]
        %230 = vmatprep.subr.mxu0 0.0
        %v231 = vand.u32 %v214, 4294901760
        %232 = vmatpush1.msra.mxu0 %v231
        %233 = vmatprep.subr.mxu0 0.0
        %v234 = vand.u32 %v215, 4294901760
        %235 = vmatpush1.msra.mxu0 %v234
        %236 = vmatprep.subr.mxu0 0.0
        %v237 = vand.u32 %v216, 4294901760
        %238 = vmatpush1.msra.mxu0 %v237
        %239 = vmatprep.subr.mxu0 0.0
        %v240 = vand.u32 %v217, 4294901760
        %241 = vmatpush1.msra.mxu0 %v240
        %242 = vmatprep.subr.mxu0 0.0
        %v243 = vand.u32 %v218, 4294901760
        %244 = vmatpush1.msra.mxu0 %v243
        %245 = vmatprep.subr.mxu0 0.0
        %v246 = vand.u32 %v219, 4294901760
        %247 = vmatpush1.msra.mxu0 %v246
        %248 = vmatprep.subr.mxu0 0.0
        %v249 = vand.u32 %v220, 4294901760
        %250 = vmatpush1.msra.mxu0 %v249
        %251 = vmatprep.subr.mxu0 0.0
        %v252 = vand.u32 %v221, 4294901760
        %253 = vmatpush1.msra.mxu0 %v252
        %254 = vmatprep.subr.mxu0 0.0
        %v255 = vand.u32 %v222, 4294901760
        %256 = vmatpush1.msra.mxu0 %v255
        %257 = vmatprep.subr.mxu0 0.0
        %v258 = vand.u32 %v223, 4294901760
        %259 = vmatpush1.msra.mxu0 %v258
        %260 = vmatprep.subr.mxu0 0.0
        %v261 = vand.u32 %v224, 4294901760
        %262 = vmatpush1.msra.mxu0 %v261
        %263 = vmatprep.subr.mxu0 0.0
        %v264 = vand.u32 %v225, 4294901760
        %265 = vmatpush1.msra.mxu0 %v264
        %266 = vmatprep.subr.mxu0 0.0
        %v267 = vand.u32 %v226, 4294901760
        %268 = vmatpush1.msra.mxu0 %v267
        %269 = vmatprep.subr.mxu0 0.0
        %v270 = vand.u32 %v227, 4294901760
        %271 = vmatpush1.msra.mxu0 %v270
        %272 = vmatprep.subr.mxu0 0.0
        %v273 = vand.u32 %v228, 4294901760
        %274 = vmatpush1.msra.mxu0 %v273
        %275 = vmatprep.subr.mxu0 0.0
        %v276 = vand.u32 %v229, 4294901760
        %277 = vmatpush1.msra.mxu0 %v276
        %278 = vmatprep.subr.mxu0 0.0
        %279 = vmatpush1.msra.mxu0 0.0
        %280 = vmatprep.subr.mxu0 0.0
        %281 = vmatpush1.msra.mxu0 0.0
        %282 = vmatprep.subr.mxu0 0.0
        %283 = vmatpush1.msra.mxu0 0.0
        %284 = vmatprep.subr.mxu0 0.0
        %285 = vmatpush1.msra.mxu0 0.0
        %286 = vmatprep.subr.mxu0 0.0
        %287 = vmatpush1.msra.mxu0 0.0
        %288 = vmatprep.subr.mxu0 0.0
        %289 = vmatpush1.msra.mxu0 0.0
        %290 = vmatprep.subr.mxu0 0.0
        %291 = vmatpush1.msra.mxu0 0.0
        %292 = vmatprep.subr.mxu0 0.0
        %293 = vmatpush1.msra.mxu0 0.0
        %294 = vmatprep.subr.mxu0 0.0
        %295 = vmatpush1.msra.mxu0 0.0
        %296 = vmatprep.subr.mxu0 0.0
        %297 = vmatpush1.msra.mxu0 0.0
        %298 = vmatprep.subr.mxu0 0.0
        %299 = vmatpush1.msra.mxu0 0.0
        %300 = vmatprep.subr.mxu0 0.0
        %301 = vmatpush1.msra.mxu0 0.0
        %302 = vmatprep.subr.mxu0 0.0
        %303 = vmatpush1.msra.mxu0 0.0
        %304 = vmatprep.subr.mxu0 0.0
        %305 = vmatpush1.msra.mxu0 0.0
        %306 = vmatprep.subr.mxu0 0.0
        %307 = vmatpush1.msra.mxu0 0.0
        %308 = vmatprep.subr.mxu0 0.0
        %309 = vmatpush1.msra.mxu0 0.0
        %310 = vmatprep.mubr.f32.mxu0 0.0
        %311 = vmatmul.mubr.f32.gmra.mrb[0].mxu0 0.0
        %v312 = vpop.f32.mrb[0].mxu0
        %v313 = vadd.f32 0.0, %v312
        %v314 = vpop.f32.mrb[0].mxu0
        %315 = vdwg.mxu0
        %316 = vmatprep.subr.mxu0 0.0
        %v317 = vand.u32 %v214, 4294901760
        %v318 = vsub.f32 %v214, %v317
        %v319 = vand.u32 %v318, 4294901760
        %v320 = vsub.f32 %v318, %v319
        %v321 = vand.u32 %v320, 4294901760
        %322 = vmatpush1.msra.mxu0 %v321
        %323 = vmatprep.subr.mxu0 0.0
        %v324 = vand.u32 %v215, 4294901760
        %v325 = vsub.f32 %v215, %v324
        %v326 = vand.u32 %v325, 4294901760
        %v327 = vsub.f32 %v325, %v326
        %v328 = vand.u32 %v327, 4294901760
        %329 = vmatpush1.msra.mxu0 %v328
        %330 = vmatprep.subr.mxu0 0.0
        %v331 = vand.u32 %v216, 4294901760
        %v332 = vsub.f32 %v216, %v331
        %v333 = vand.u32 %v332, 4294901760
        %v334 = vsub.f32 %v332, %v333
        %v335 = vand.u32 %v334, 4294901760
        %336 = vmatpush1.msra.mxu0 %v335
        %337 = vmatprep.subr.mxu0 0.0
        %v338 = vand.u32 %v217, 4294901760
        %v339 = vsub.f32 %v217, %v338
        %v340 = vand.u32 %v339, 4294901760
        %v341 = vsub.f32 %v339, %v340
        %v342 = vand.u32 %v341, 4294901760
        %343 = vmatpush1.msra.mxu0 %v342
        %344 = vmatprep.subr.mxu0 0.0
        %v345 = vand.u32 %v218, 4294901760
        %v346 = vsub.f32 %v218, %v345
        %v347 = vand.u32 %v346, 4294901760
        %v348 = vsub.f32 %v346, %v347
        %v349 = vand.u32 %v348, 4294901760
        %350 = vmatpush1.msra.mxu0 %v349
        %351 = vmatprep.subr.mxu0 0.0
        %v352 = vand.u32 %v219, 4294901760
        %v353 = vsub.f32 %v219, %v352
        %v354 = vand.u32 %v353, 4294901760
        %v355 = vsub.f32 %v353, %v354
        %v356 = vand.u32 %v355, 4294901760
        %357 = vmatpush1.msra.mxu0 %v356
        %358 = vmatprep.subr.mxu0 0.0
        %v359 = vand.u32 %v220, 4294901760
        %v360 = vsub.f32 %v220, %v359
        %v361 = vand.u32 %v360, 4294901760
        %v362 = vsub.f32 %v360, %v361
        %v363 = vand.u32 %v362, 4294901760
        %364 = vmatpush1.msra.mxu0 %v363
        %365 = vmatprep.subr.mxu0 0.0
        %v366 = vand.u32 %v221, 4294901760
        %v367 = vsub.f32 %v221, %v366
        %v368 = vand.u32 %v367, 4294901760
        %v369 = vsub.f32 %v367, %v368
        %v370 = vand.u32 %v369, 4294901760
        %371 = vmatpush1.msra.mxu0 %v370
        %372 = vmatprep.subr.mxu0 0.0
        %v373 = vand.u32 %v222, 4294901760
        %v374 = vsub.f32 %v222, %v373
        %v375 = vand.u32 %v374, 4294901760
        %v376 = vsub.f32 %v374, %v375
        %v377 = vand.u32 %v376, 4294901760
        %378 = vmatpush1.msra.mxu0 %v377
        %379 = vmatprep.subr.mxu0 0.0
        %v380 = vand.u32 %v223, 4294901760
        %v381 = vsub.f32 %v223, %v380
        %v382 = vand.u32 %v381, 4294901760
        %v383 = vsub.f32 %v381, %v382
        %v384 = vand.u32 %v383, 4294901760
        %385 = vmatpush1.msra.mxu0 %v384
        %386 = vmatprep.subr.mxu0 0.0
        %v387 = vand.u32 %v224, 4294901760
        %v388 = vsub.f32 %v224, %v387
        %v389 = vand.u32 %v388, 4294901760
        %v390 = vsub.f32 %v388, %v389
        %v391 = vand.u32 %v390, 4294901760
        %392 = vmatpush1.msra.mxu0 %v391
        %393 = vmatprep.subr.mxu0 0.0
        %v394 = vand.u32 %v225, 4294901760
        %v395 = vsub.f32 %v225, %v394
        %v396 = vand.u32 %v395, 4294901760
        %v397 = vsub.f32 %v395, %v396
        %v398 = vand.u32 %v397, 4294901760
        %399 = vmatpush1.msra.mxu0 %v398
        %400 = vmatprep.subr.mxu0 0.0
        %v401 = vand.u32 %v226, 4294901760
        %v402 = vsub.f32 %v226, %v401
        %v403 = vand.u32 %v402, 4294901760
        %v404 = vsub.f32 %v402, %v403
        %v405 = vand.u32 %v404, 4294901760
        %406 = vmatpush1.msra.mxu0 %v405
        %407 = vmatprep.subr.mxu0 0.0
        %v408 = vand.u32 %v227, 4294901760
        %v409 = vsub.f32 %v227, %v408
        %v410 = vand.u32 %v409, 4294901760
        %v411 = vsub.f32 %v409, %v410
        %v412 = vand.u32 %v411, 4294901760
        %413 = vmatpush1.msra.mxu0 %v412
        %414 = vmatprep.subr.mxu0 0.0
        %v415 = vand.u32 %v228, 4294901760
        %v416 = vsub.f32 %v228, %v415
        %v417 = vand.u32 %v416, 4294901760
        %v418 = vsub.f32 %v416, %v417
        %v419 = vand.u32 %v418, 4294901760
        %420 = vmatpush1.msra.mxu0 %v419
        %421 = vmatprep.subr.mxu0 0.0
        %v422 = vand.u32 %v229, 4294901760
        %v423 = vsub.f32 %v229, %v422
        %v424 = vand.u32 %v423, 4294901760
        %v425 = vsub.f32 %v423, %v424
        %v426 = vand.u32 %v425, 4294901760
        %427 = vmatpush1.msra.mxu0 %v426
        %428 = vmatprep.subr.mxu0 0.0
        %429 = vmatpush1.msra.mxu0 0.0
        %430 = vmatprep.subr.mxu0 0.0
        %431 = vmatpush1.msra.mxu0 0.0
        %432 = vmatprep.subr.mxu0 0.0
        %433 = vmatpush1.msra.mxu0 0.0
        %434 = vmatprep.subr.mxu0 0.0
        %435 = vmatpush1.msra.mxu0 0.0
        %436 = vmatprep.subr.mxu0 0.0
        %437 = vmatpush1.msra.mxu0 0.0
        %438 = vmatprep.subr.mxu0 0.0
        %439 = vmatpush1.msra.mxu0 0.0
        %440 = vmatprep.subr.mxu0 0.0
        %441 = vmatpush1.msra.mxu0 0.0
        %442 = vmatprep.subr.mxu0 0.0
        %443 = vmatpush1.msra.mxu0 0.0
        %444 = vmatprep.subr.mxu0 0.0
        %445 = vmatpush1.msra.mxu0 0.0
        %446 = vmatprep.subr.mxu0 0.0
        %447 = vmatpush1.msra.mxu0 0.0
        %448 = vmatprep.subr.mxu0 0.0
        %449 = vmatpush1.msra.mxu0 0.0
        %450 = vmatprep.subr.mxu0 0.0
        %451 = vmatpush1.msra.mxu0 0.0
        %452 = vmatprep.subr.mxu0 0.0
        %453 = vmatpush1.msra.mxu0 0.0
        %454 = vmatprep.subr.mxu0 0.0
        %455 = vmatpush1.msra.mxu0 0.0
        %456 = vmatprep.subr.mxu0 0.0
        %457 = vmatpush1.msra.mxu0 0.0
        %458 = vmatprep.subr.mxu0 0.0
        %459 = vmatpush1.msra.mxu0 0.0
        %460 = vmatprep.mubr.f32.mxu0 0.0
        %461 = vmatmul.mubr.f32.gmra.mrb[0].mxu0 1.0
        %v462 = vpop.f32.mrb[0].mxu0
        %v463 = vadd.f32 %v313, %v462
        %v464 = vpop.f32.mrb[0].mxu0
        %465 = vdwg.mxu0
        %466 = vmatprep.subr.mxu0 0.0
        %v467 = vand.u32 %v214, 4294901760
        %v468 = vsub.f32 %v214, %v467
        %469 = vmatpush1.msra.mxu0 %v468
        %470 = vmatprep.subr.mxu0 0.0
        %v471 = vand.u32 %v215, 4294901760
        %v472 = vsub.f32 %v215, %v471
        %473 = vmatpush1.msra.mxu0 %v472
        %474 = vmatprep.subr.mxu0 0.0
        %v475 = vand.u32 %v216, 4294901760
        %v476 = vsub.f32 %v216, %v475
        %477 = vmatpush1.msra.mxu0 %v476
        %478 = vmatprep.subr.mxu0 0.0
        %v479 = vand.u32 %v217, 4294901760
        %v480 = vsub.f32 %v217, %v479
        %481 = vmatpush1.msra.mxu0 %v480
        %482 = vmatprep.subr.mxu0 0.0
        %v483 = vand.u32 %v218, 4294901760
        %v484 = vsub.f32 %v218, %v483
        %485 = vmatpush1.msra.mxu0 %v484
        %486 = vmatprep.subr.mxu0 0.0
        %v487 = vand.u32 %v219, 4294901760
        %v488 = vsub.f32 %v219, %v487
        %489 = vmatpush1.msra.mxu0 %v488
        %490 = vmatprep.subr.mxu0 0.0
        %v491 = vand.u32 %v220, 4294901760
        %v492 = vsub.f32 %v220, %v491
        %493 = vmatpush1.msra.mxu0 %v492
        %494 = vmatprep.subr.mxu0 0.0
        %v495 = vand.u32 %v221, 4294901760
        %v496 = vsub.f32 %v221, %v495
        %497 = vmatpush1.msra.mxu0 %v496
        %498 = vmatprep.subr.mxu0 0.0
        %v499 = vand.u32 %v222, 4294901760
        %v500 = vsub.f32 %v222, %v499
        %501 = vmatpush1.msra.mxu0 %v500
        %502 = vmatprep.subr.mxu0 0.0
        %v503 = vand.u32 %v223, 4294901760
        %v504 = vsub.f32 %v223, %v503
        %505 = vmatpush1.msra.mxu0 %v504
        %506 = vmatprep.subr.mxu0 0.0
        %v507 = vand.u32 %v224, 4294901760
        %v508 = vsub.f32 %v224, %v507
        %509 = vmatpush1.msra.mxu0 %v508
        %510 = vmatprep.subr.mxu0 0.0
        %v511 = vand.u32 %v225, 4294901760
        %v512 = vsub.f32 %v225, %v511
        %513 = vmatpush1.msra.mxu0 %v512
        %514 = vmatprep.subr.mxu0 0.0
        %v515 = vand.u32 %v226, 4294901760
        %v516 = vsub.f32 %v226, %v515
        %517 = vmatpush1.msra.mxu0 %v516
        %518 = vmatprep.subr.mxu0 0.0
        %v519 = vand.u32 %v227, 4294901760
        %v520 = vsub.f32 %v227, %v519
        %521 = vmatpush1.msra.mxu0 %v520
        %522 = vmatprep.subr.mxu0 0.0
        %v523 = vand.u32 %v228, 4294901760
        %v524 = vsub.f32 %v228, %v523
        %525 = vmatpush1.msra.mxu0 %v524
        %526 = vmatprep.subr.mxu0 0.0
        %v527 = vand.u32 %v229, 4294901760
        %v528 = vsub.f32 %v229, %v527
        %529 = vmatpush1.msra.mxu0 %v528
        %530 = vmatprep.subr.mxu0 0.0
        %531 = vmatpush1.msra.mxu0 0.0
        %532 = vmatprep.subr.mxu0 0.0
        %533 = vmatpush1.msra.mxu0 0.0
        %534 = vmatprep.subr.mxu0 0.0
        %535 = vmatpush1.msra.mxu0 0.0
        %536 = vmatprep.subr.mxu0 0.0
        %537 = vmatpush1.msra.mxu0 0.0
        %538 = vmatprep.subr.mxu0 0.0
        %539 = vmatpush1.msra.mxu0 0.0
        %540 = vmatprep.subr.mxu0 0.0
        %541 = vmatpush1.msra.mxu0 0.0
        %542 = vmatprep.subr.mxu0 0.0
        %543 = vmatpush1.msra.mxu0 0.0
        %544 = vmatprep.subr.mxu0 0.0
        %545 = vmatpush1.msra.mxu0 0.0
        %546 = vmatprep.subr.mxu0 0.0
        %547 = vmatpush1.msra.mxu0 0.0
        %548 = vmatprep.subr.mxu0 0.0
        %549 = vmatpush1.msra.mxu0 0.0
        %550 = vmatprep.subr.mxu0 0.0
        %551 = vmatpush1.msra.mxu0 0.0
        %552 = vmatprep.subr.mxu0 0.0
        %553 = vmatpush1.msra.mxu0 0.0
        %554 = vmatprep.subr.mxu0 0.0
        %555 = vmatpush1.msra.mxu0 0.0
        %556 = vmatprep.subr.mxu0 0.0
        %557 = vmatpush1.msra.mxu0 0.0
        %558 = vmatprep.subr.mxu0 0.0
        %559 = vmatpush1.msra.mxu0 0.0
        %560 = vmatprep.subr.mxu0 0.0
        %561 = vmatpush1.msra.mxu0 0.0
        %562 = vmatprep.mubr.f32.mxu0 0.0
        %563 = vmatmul.mubr.f32.gmra.mrb[0].mxu0 0.0
        %v564 = vpop.f32.mrb[0].mxu0
        %v565 = vadd.f32 %v463, %v564
        %v566 = vpop.f32.mrb[0].mxu0
        %567 = vdwg.mxu0
        %568 = vmatprep.subr.mxu0 0.0
        %v569 = vand.u32 %v214, 4294901760
        %570 = vmatpush1.msra.mxu0 %v569
        %571 = vmatprep.subr.mxu0 0.0
        %v572 = vand.u32 %v215, 4294901760
        %573 = vmatpush1.msra.mxu0 %v572
        %574 = vmatprep.subr.mxu0 0.0
        %v575 = vand.u32 %v216, 4294901760
        %576 = vmatpush1.msra.mxu0 %v575
        %577 = vmatprep.subr.mxu0 0.0
        %v578 = vand.u32 %v217, 4294901760
        %579 = vmatpush1.msra.mxu0 %v578
        %580 = vmatprep.subr.mxu0 0.0
        %v581 = vand.u32 %v218, 4294901760
        %582 = vmatpush1.msra.mxu0 %v581
        %583 = vmatprep.subr.mxu0 0.0
        %v584 = vand.u32 %v219, 4294901760
        %585 = vmatpush1.msra.mxu0 %v584
        %586 = vmatprep.subr.mxu0 0.0
        %v587 = vand.u32 %v220, 4294901760
        %588 = vmatpush1.msra.mxu0 %v587
        %589 = vmatprep.subr.mxu0 0.0
        %v590 = vand.u32 %v221, 4294901760
        %591 = vmatpush1.msra.mxu0 %v590
        %592 = vmatprep.subr.mxu0 0.0
        %v593 = vand.u32 %v222, 4294901760
        %594 = vmatpush1.msra.mxu0 %v593
        %595 = vmatprep.subr.mxu0 0.0
        %v596 = vand.u32 %v223, 4294901760
        %597 = vmatpush1.msra.mxu0 %v596
        %598 = vmatprep.subr.mxu0 0.0
        %v599 = vand.u32 %v224, 4294901760
        %600 = vmatpush1.msra.mxu0 %v599
        %601 = vmatprep.subr.mxu0 0.0
        %v602 = vand.u32 %v225, 4294901760
        %603 = vmatpush1.msra.mxu0 %v602
        %604 = vmatprep.subr.mxu0 0.0
        %v605 = vand.u32 %v226, 4294901760
        %606 = vmatpush1.msra.mxu0 %v605
        %607 = vmatprep.subr.mxu0 0.0
        %v608 = vand.u32 %v227, 4294901760
        %609 = vmatpush1.msra.mxu0 %v608
        %610 = vmatprep.subr.mxu0 0.0
        %v611 = vand.u32 %v228, 4294901760
        %612 = vmatpush1.msra.mxu0 %v611
        %613 = vmatprep.subr.mxu0 0.0
        %v614 = vand.u32 %v229, 4294901760
        %615 = vmatpush1.msra.mxu0 %v614
        %616 = vmatprep.subr.mxu0 0.0
        %617 = vmatpush1.msra.mxu0 0.0
        %618 = vmatprep.subr.mxu0 0.0
        %619 = vmatpush1.msra.mxu0 0.0
        %620 = vmatprep.subr.mxu0 0.0
        %621 = vmatpush1.msra.mxu0 0.0
        %622 = vmatprep.subr.mxu0 0.0
        %623 = vmatpush1.msra.mxu0 0.0
        %624 = vmatprep.subr.mxu0 0.0
        %625 = vmatpush1.msra.mxu0 0.0
        %626 = vmatprep.subr.mxu0 0.0
        %627 = vmatpush1.msra.mxu0 0.0
        %628 = vmatprep.subr.mxu0 0.0
        %629 = vmatpush1.msra.mxu0 0.0
        %630 = vmatprep.subr.mxu0 0.0
        %631 = vmatpush1.msra.mxu0 0.0
        %632 = vmatprep.subr.mxu0 0.0
        %633 = vmatpush1.msra.mxu0 0.0
        %634 = vmatprep.subr.mxu0 0.0
        %635 = vmatpush1.msra.mxu0 0.0
        %636 = vmatprep.subr.mxu0 0.0
        %637 = vmatpush1.msra.mxu0 0.0
        %638 = vmatprep.subr.mxu0 0.0
        %639 = vmatpush1.msra.mxu0 0.0
        %640 = vmatprep.subr.mxu0 0.0
        %641 = vmatpush1.msra.mxu0 0.0
        %642 = vmatprep.subr.mxu0 0.0
        %643 = vmatpush1.msra.mxu0 0.0
        %644 = vmatprep.subr.mxu0 0.0
        %645 = vmatpush1.msra.mxu0 0.0
        %646 = vmatprep.subr.mxu0 0.0
        %647 = vmatpush1.msra.mxu0 0.0
        %648 = vmatprep.mubr.f32.mxu0 0.0
        %649 = vmatmul.mubr.f32.gmra.mrb[0].mxu0 0.0
        %v650 = vpop.f32.mrb[0].mxu0
        %v651 = vadd.f32 %v565, %v650
        %v652 = vpop.f32.mrb[0].mxu0
        %653 = vdwg.mxu0
        %654 = vmatprep.subr.mxu0 0.0
        %v655 = vand.u32 %v214, 4294901760
        %v656 = vsub.f32 %v214, %v655
        %v657 = vand.u32 %v656, 4294901760
        %658 = vmatpush1.msra.mxu0 %v657
        %659 = vmatprep.subr.mxu0 0.0
        %v660 = vand.u32 %v215, 4294901760
        %v661 = vsub.f32 %v215, %v660
        %v662 = vand.u32 %v661, 4294901760
        %663 = vmatpush1.msra.mxu0 %v662
        %664 = vmatprep.subr.mxu0 0.0
        %v665 = vand.u32 %v216, 4294901760
        %v666 = vsub.f32 %v216, %v665
        %v667 = vand.u32 %v666, 4294901760
        %668 = vmatpush1.msra.mxu0 %v667
        %669 = vmatprep.subr.mxu0 0.0
        %v670 = vand.u32 %v217, 4294901760
        %v671 = vsub.f32 %v217, %v670
        %v672 = vand.u32 %v671, 4294901760
        %673 = vmatpush1.msra.mxu0 %v672
        %674 = vmatprep.subr.mxu0 0.0
        %v675 = vand.u32 %v218, 4294901760
        %v676 = vsub.f32 %v218, %v675
        %v677 = vand.u32 %v676, 4294901760
        %678 = vmatpush1.msra.mxu0 %v677
        %679 = vmatprep.subr.mxu0 0.0
        %v680 = vand.u32 %v219, 4294901760
        %v681 = vsub.f32 %v219, %v680
        %v682 = vand.u32 %v681, 4294901760
        %683 = vmatpush1.msra.mxu0 %v682
        %684 = vmatprep.subr.mxu0 0.0
        %v685 = vand.u32 %v220, 4294901760
        %v686 = vsub.f32 %v220, %v685
        %v687 = vand.u32 %v686, 4294901760
        %688 = vmatpush1.msra.mxu0 %v687
        %689 = vmatprep.subr.mxu0 0.0
        %v690 = vand.u32 %v221, 4294901760
        %v691 = vsub.f32 %v221, %v690
        %v692 = vand.u32 %v691, 4294901760
        %693 = vmatpush1.msra.mxu0 %v692
        %694 = vmatprep.subr.mxu0 0.0
        %v695 = vand.u32 %v222, 4294901760
        %v696 = vsub.f32 %v222, %v695
        %v697 = vand.u32 %v696, 4294901760
        %698 = vmatpush1.msra.mxu0 %v697
        %699 = vmatprep.subr.mxu0 0.0
        %v700 = vand.u32 %v223, 4294901760
        %v701 = vsub.f32 %v223, %v700
        %v702 = vand.u32 %v701, 4294901760
        %703 = vmatpush1.msra.mxu0 %v702
        %704 = vmatprep.subr.mxu0 0.0
        %v705 = vand.u32 %v224, 4294901760
        %v706 = vsub.f32 %v224, %v705
        %v707 = vand.u32 %v706, 4294901760
        %708 = vmatpush1.msra.mxu0 %v707
        %709 = vmatprep.subr.mxu0 0.0
        %v710 = vand.u32 %v225, 4294901760
        %v711 = vsub.f32 %v225, %v710
        %v712 = vand.u32 %v711, 4294901760
        %713 = vmatpush1.msra.mxu0 %v712
        %714 = vmatprep.subr.mxu0 0.0
        %v715 = vand.u32 %v226, 4294901760
        %v716 = vsub.f32 %v226, %v715
        %v717 = vand.u32 %v716, 4294901760
        %718 = vmatpush1.msra.mxu0 %v717
        %719 = vmatprep.subr.mxu0 0.0
        %v720 = vand.u32 %v227, 4294901760
        %v721 = vsub.f32 %v227, %v720
        %v722 = vand.u32 %v721, 4294901760
        %723 = vmatpush1.msra.mxu0 %v722
        %724 = vmatprep.subr.mxu0 0.0
        %v725 = vand.u32 %v228, 4294901760
        %v726 = vsub.f32 %v228, %v725
        %v727 = vand.u32 %v726, 4294901760
        %728 = vmatpush1.msra.mxu0 %v727
        %729 = vmatprep.subr.mxu0 0.0
        %v730 = vand.u32 %v229, 4294901760
        %v731 = vsub.f32 %v229, %v730
        %v732 = vand.u32 %v731, 4294901760
        %733 = vmatpush1.msra.mxu0 %v732
        %734 = vmatprep.subr.mxu0 0.0
        %735 = vmatpush1.msra.mxu0 0.0
        %736 = vmatprep.subr.mxu0 0.0
        %737 = vmatpush1.msra.mxu0 0.0
        %738 = vmatprep.subr.mxu0 0.0
        %739 = vmatpush1.msra.mxu0 0.0
        %740 = vmatprep.subr.mxu0 0.0
        %741 = vmatpush1.msra.mxu0 0.0
        %742 = vmatprep.subr.mxu0 0.0
        %743 = vmatpush1.msra.mxu0 0.0
        %744 = vmatprep.subr.mxu0 0.0
        %745 = vmatpush1.msra.mxu0 0.0
        %746 = vmatprep.subr.mxu0 0.0
        %747 = vmatpush1.msra.mxu0 0.0
        %748 = vmatprep.subr.mxu0 0.0
        %749 = vmatpush1.msra.mxu0 0.0
        %750 = vmatprep.subr.mxu0 0.0
        %751 = vmatpush1.msra.mxu0 0.0
        %752 = vmatprep.subr.mxu0 0.0
        %753 = vmatpush1.msra.mxu0 0.0
        %754 = vmatprep.subr.mxu0 0.0
        %755 = vmatpush1.msra.mxu0 0.0
        %756 = vmatprep.subr.mxu0 0.0
        %757 = vmatpush1.msra.mxu0 0.0
        %758 = vmatprep.subr.mxu0 0.0
        %759 = vmatpush1.msra.mxu0 0.0
        %760 = vmatprep.subr.mxu0 0.0
        %761 = vmatpush1.msra.mxu0 0.0
        %762 = vmatprep.subr.mxu0 0.0
        %763 = vmatpush1.msra.mxu0 0.0
        %764 = vmatprep.subr.mxu0 0.0
        %765 = vmatpush1.msra.mxu0 0.0
        %766 = vmatprep.mubr.f32.mxu0 0.0
        %767 = vmatmul.mubr.f32.gmra.mrb[0].mxu0 1.0
        %v768 = vpop.f32.mrb[0].mxu0
        %v769 = vadd.f32 %v651, %v768
        %v770 = vpop.f32.mrb[0].mxu0
        %771 = vdwg.mxu0
        %772 = vmatprep.subr.mxu0 0.0
        %v773 = vand.u32 %v214, 4294901760
        %774 = vmatpush1.msra.mxu0 %v773
        %775 = vmatprep.subr.mxu0 0.0
        %v776 = vand.u32 %v215, 4294901760
        %777 = vmatpush1.msra.mxu0 %v776
        %778 = vmatprep.subr.mxu0 0.0
        %v779 = vand.u32 %v216, 4294901760
        %780 = vmatpush1.msra.mxu0 %v779
        %781 = vmatprep.subr.mxu0 0.0
        %v782 = vand.u32 %v217, 4294901760
        %783 = vmatpush1.msra.mxu0 %v782
        %784 = vmatprep.subr.mxu0 0.0
        %v785 = vand.u32 %v218, 4294901760
        %786 = vmatpush1.msra.mxu0 %v785
        %787 = vmatprep.subr.mxu0 0.0
        %v788 = vand.u32 %v219, 4294901760
        %789 = vmatpush1.msra.mxu0 %v788
        %790 = vmatprep.subr.mxu0 0.0
        %v791 = vand.u32 %v220, 4294901760
        %792 = vmatpush1.msra.mxu0 %v791
        %793 = vmatprep.subr.mxu0 0.0
        %v794 = vand.u32 %v221, 4294901760
        %795 = vmatpush1.msra.mxu0 %v794
        %796 = vmatprep.subr.mxu0 0.0
        %v797 = vand.u32 %v222, 4294901760
        %798 = vmatpush1.msra.mxu0 %v797
        %799 = vmatprep.subr.mxu0 0.0
        %v800 = vand.u32 %v223, 4294901760
        %801 = vmatpush1.msra.mxu0 %v800
        %802 = vmatprep.subr.mxu0 0.0
        %v803 = vand.u32 %v224, 4294901760
        %804 = vmatpush1.msra.mxu0 %v803
        %805 = vmatprep.subr.mxu0 0.0
        %v806 = vand.u32 %v225, 4294901760
        %807 = vmatpush1.msra.mxu0 %v806
        %808 = vmatprep.subr.mxu0 0.0
        %v809 = vand.u32 %v226, 4294901760
        %810 = vmatpush1.msra.mxu0 %v809
        %811 = vmatprep.subr.mxu0 0.0
        %v812 = vand.u32 %v227, 4294901760
        %813 = vmatpush1.msra.mxu0 %v812
        %814 = vmatprep.subr.mxu0 0.0
        %v815 = vand.u32 %v228, 4294901760
        %816 = vmatpush1.msra.mxu0 %v815
        %817 = vmatprep.subr.mxu0 0.0
        %v818 = vand.u32 %v229, 4294901760
        %819 = vmatpush1.msra.mxu0 %v818
        %820 = vmatprep.subr.mxu0 0.0
        %821 = vmatpush1.msra.mxu0 0.0
        %822 = vmatprep.subr.mxu0 0.0
        %823 = vmatpush1.msra.mxu0 0.0
        %824 = vmatprep.subr.mxu0 0.0
        %825 = vmatpush1.msra.mxu0 0.0
        %826 = vmatprep.subr.mxu0 0.0
        %827 = vmatpush1.msra.mxu0 0.0
        %828 = vmatprep.subr.mxu0 0.0
        %829 = vmatpush1.msra.mxu0 0.0
        %830 = vmatprep.subr.mxu0 0.0
        %831 = vmatpush1.msra.mxu0 0.0
        %832 = vmatprep.subr.mxu0 0.0
        %833 = vmatpush1.msra.mxu0 0.0
        %834 = vmatprep.subr.mxu0 0.0
        %835 = vmatpush1.msra.mxu0 0.0
        %836 = vmatprep.subr.mxu0 0.0
        %837 = vmatpush1.msra.mxu0 0.0
        %838 = vmatprep.subr.mxu0 0.0
        %839 = vmatpush1.msra.mxu0 0.0
        %840 = vmatprep.subr.mxu0 0.0
        %841 = vmatpush1.msra.mxu0 0.0
        %842 = vmatprep.subr.mxu0 0.0
        %843 = vmatpush1.msra.mxu0 0.0
        %844 = vmatprep.subr.mxu0 0.0
        %845 = vmatpush1.msra.mxu0 0.0
        %846 = vmatprep.subr.mxu0 0.0
        %847 = vmatpush1.msra.mxu0 0.0
        %848 = vmatprep.subr.mxu0 0.0
        %849 = vmatpush1.msra.mxu0 0.0
        %850 = vmatprep.subr.mxu0 0.0
        %851 = vmatpush1.msra.mxu0 0.0
        %852 = vmatprep.mubr.f32.mxu0 0.0
        %853 = vmatmul.mubr.f32.gmra.mrb[0].mxu0 1.0
        %v854 = vpop.f32.mrb[0].mxu0
        %v855 = vadd.f32 %v769, %v854
        %v856 = vpop.f32.mrb[0].mxu0
        %857 = vdwg.mxu0
        %v858 = vld [vmem:[%s182] sm:$0x1]
        %v859 = vadd.f32 %v858, %v855
        %860 = vst [vmem:[%s182] sm:$0x1] %v859
        %861 = vxpose.xlu0.b32.start [1/16] %v214, 128
        %862 = vxpose.xlu0.b32.cont [2/16] %v215, 128
        %863 = vxpose.xlu0.b32.cont [3/16] %v216, 128
        %864 = vxpose.xlu0.b32.cont [4/16] %v217, 128
        %865 = vxpose.xlu0.b32.cont [5/16] %v218, 128
        %866 = vxpose.xlu0.b32.cont [6/16] %v219, 128
        %867 = vxpose.xlu0.b32.cont [7/16] %v220, 128
        %868 = vxpose.xlu0.b32.cont [8/16] %v221, 128
        %869 = vxpose.xlu0.b32.cont [9/16] %v222, 128
        %870 = vxpose.xlu0.b32.cont [10/16] %v223, 128
        %871 = vxpose.xlu0.b32.cont [11/16] %v224, 128
        %872 = vxpose.xlu0.b32.cont [12/16] %v225, 128
        %873 = vxpose.xlu0.b32.cont [13/16] %v226, 128
        %874 = vxpose.xlu0.b32.cont [14/16] %v227, 128
        %875 = vxpose.xlu0.b32.cont [15/16] %v228, 128
        %876 = vxpose.xlu0.b32.end [16/16] %v229, 128
        %v877 = vpop.trf.xlu0
        %v878 = vpop.trf.xlu0
        %v879 = vpop.trf.xlu0
        %v880 = vpop.trf.xlu0
        %v881 = vpop.trf.xlu0
        %v882 = vpop.trf.xlu0
        %v883 = vpop.trf.xlu0
        %v884 = vpop.trf.xlu0
        %v885 = vpop.trf.xlu0
        %v886 = vpop.trf.xlu0
        %v887 = vpop.trf.xlu0
        %v888 = vpop.trf.xlu0
        %v889 = vpop.trf.xlu0
        %v890 = vpop.trf.xlu0
        %v891 = vpop.trf.xlu0
        %v892 = vpop.trf.xlu0
        %893 = vmatprep.subr.mxu0 0.0
        %v894 = vand.u32 %v214, 4294901760
        %895 = vmatpush1.msra.mxu0 %v894
        %896 = vmatprep.subr.mxu0 0.0
        %v897 = vand.u32 %v215, 4294901760
        %898 = vmatpush1.msra.mxu0 %v897
        %899 = vmatprep.subr.mxu0 0.0
        %v900 = vand.u32 %v216, 4294901760
        %901 = vmatpush1.msra.mxu0 %v900
        %902 = vmatprep.subr.mxu0 0.0
        %v903 = vand.u32 %v217, 4294901760
        %904 = vmatpush1.msra.mxu0 %v903
        %905 = vmatprep.subr.mxu0 0.0
        %v906 = vand.u32 %v218, 4294901760
        %907 = vmatpush1.msra.mxu0 %v906
        %908 = vmatprep.subr.mxu0 0.0
        %v909 = vand.u32 %v219, 4294901760
        %910 = vmatpush1.msra.mxu0 %v909
        %911 = vmatprep.subr.mxu0 0.0
        %v912 = vand.u32 %v220, 4294901760
        %913 = vmatpush1.msra.mxu0 %v912
        %914 = vmatprep.subr.mxu0 0.0
        %v915 = vand.u32 %v221, 4294901760
        %916 = vmatpush1.msra.mxu0 %v915
        %917 = vmatprep.subr.mxu0 0.0
        %v918 = vand.u32 %v222, 4294901760
        %919 = vmatpush1.msra.mxu0 %v918
        %920 = vmatprep.subr.mxu0 0.0
        %v921 = vand.u32 %v223, 4294901760
        %922 = vmatpush1.msra.mxu0 %v921
        %923 = vmatprep.subr.mxu0 0.0
        %v924 = vand.u32 %v224, 4294901760
        %925 = vmatpush1.msra.mxu0 %v924
        %926 = vmatprep.subr.mxu0 0.0
        %v927 = vand.u32 %v225, 4294901760
        %928 = vmatpush1.msra.mxu0 %v927
        %929 = vmatprep.subr.mxu0 0.0
        %v930 = vand.u32 %v226, 4294901760
        %931 = vmatpush1.msra.mxu0 %v930
        %932 = vmatprep.subr.mxu0 0.0
        %v933 = vand.u32 %v227, 4294901760
        %934 = vmatpush1.msra.mxu0 %v933
        %935 = vmatprep.subr.mxu0 0.0
        %v936 = vand.u32 %v228, 4294901760
        %937 = vmatpush1.msra.mxu0 %v936
        %938 = vmatprep.subr.mxu0 0.0
        %v939 = vand.u32 %v229, 4294901760
        %940 = vmatpush1.msra.mxu0 %v939
        %941 = vmatprep.subr.mxu0 0.0
        %942 = vmatpush1.msra.mxu0 0.0
        %943 = vmatprep.subr.mxu0 0.0
        %944 = vmatpush1.msra.mxu0 0.0
        %945 = vmatprep.subr.mxu0 0.0
        %946 = vmatpush1.msra.mxu0 0.0
        %947 = vmatprep.subr.mxu0 0.0
        %948 = vmatpush1.msra.mxu0 0.0
        %949 = vmatprep.subr.mxu0 0.0
        %950 = vmatpush1.msra.mxu0 0.0
        %951 = vmatprep.subr.mxu0 0.0
        %952 = vmatpush1.msra.mxu0 0.0
        %953 = vmatprep.subr.mxu0 0.0
        %954 = vmatpush1.msra.mxu0 0.0
        %955 = vmatprep.subr.mxu0 0.0
        %956 = vmatpush1.msra.mxu0 0.0
        %957 = vmatprep.subr.mxu0 0.0
        %958 = vmatpush1.msra.mxu0 0.0
        %959 = vmatprep.subr.mxu0 0.0
        %960 = vmatpush1.msra.mxu0 0.0
        %961 = vmatprep.subr.mxu0 0.0
        %962 = vmatpush1.msra.mxu0 0.0
        %963 = vmatprep.subr.mxu0 0.0
        %964 = vmatpush1.msra.mxu0 0.0
        %965 = vmatprep.subr.mxu0 0.0
        %966 = vmatpush1.msra.mxu0 0.0
        %967 = vmatprep.subr.mxu0 0.0
        %968 = vmatpush1.msra.mxu0 0.0
        %969 = vmatprep.subr.mxu0 0.0
        %970 = vmatpush1.msra.mxu0 0.0
        %971 = vmatprep.subr.mxu0 0.0
        %972 = vmatpush1.msra.mxu0 0.0
        %973 = vmatprep.mubr.f32.mxu0 0.0
        %v974 = vand.u32 %v877, 4294901760
        %v975 = vsub.f32 %v877, %v974
        %v976 = vand.u32 %v975, 4294901760
        %v977 = vsub.f32 %v975, %v976
        %v978 = vand.u32 %v977, 4294901760
        %979 = vmatmul.mubr.f32.gmra.mrb[0].mxu0 %v978
        %v980 = vpop.f32.mrb[0].mxu0
        %v981 = vadd.f32 0.0, %v980
        %v982 = vpop.f32.mrb[0].mxu0
        %983 = vmatprep.mubr.f32.mxu0 0.0
        %v984 = vand.u32 %v878, 4294901760
        %v985 = vsub.f32 %v878, %v984
        %v986 = vand.u32 %v985, 4294901760
        %v987 = vsub.f32 %v985, %v986
        %v988 = vand.u32 %v987, 4294901760
        %989 = vmatmul.mubr.f32.gmra.mrb[0].mxu0 %v988
        %v990 = vpop.f32.mrb[0].mxu0
        %v991 = vadd.f32 0.0, %v990
        %v992 = vpop.f32.mrb[0].mxu0
        %993 = vmatprep.mubr.f32.mxu0 0.0
        %v994 = vand.u32 %v879, 4294901760
        %v995 = vsub.f32 %v879, %v994
        %v996 = vand.u32 %v995, 4294901760
        %v997 = vsub.f32 %v995, %v996
        %v998 = vand.u32 %v997, 4294901760
        %999 = vmatmul.mubr.f32.gmra.mrb[0].mxu0 %v998
        %v1000 = vpop.f32.mrb[0].mxu0
        %v1001 = vadd.f32 0.0, %v1000
        %v1002 = vpop.f32.mrb[0].mxu0
        %1003 = vmatprep.mubr.f32.mxu0 0.0
        %v1004 = vand.u32 %v880, 4294901760
        %v1005 = vsub.f32 %v880, %v1004
        %v1006 = vand.u32 %v1005, 4294901760
        %v1007 = vsub.f32 %v1005, %v1006
        %v1008 = vand.u32 %v1007, 4294901760
        %1009 = vmatmul.mubr.f32.gmra.mrb[0].mxu0 %v1008
        %v1010 = vpop.f32.mrb[0].mxu0
        %v1011 = vadd.f32 0.0, %v1010
        %v1012 = vpop.f32.mrb[0].mxu0
        %1013 = vmatprep.mubr.f32.mxu0 0.0
        %v1014 = vand.u32 %v881, 4294901760
        %v1015 = vsub.f32 %v881, %v1014
        %v1016 = vand.u32 %v1015, 4294901760
        %v1017 = vsub.f32 %v1015, %v1016
        %v1018 = vand.u32 %v1017, 4294901760
        %1019 = vmatmul.mubr.f32.gmra.mrb[0].mxu0 %v1018
        %v1020 = vpop.f32.mrb[0].mxu0
        %v1021 = vadd.f32 0.0, %v1020
        %v1022 = vpop.f32.mrb[0].mxu0
        %1023 = vmatprep.mubr.f32.mxu0 0.0
        %v1024 = vand.u32 %v882, 4294901760
        %v1025 = vsub.f32 %v882, %v1024
        %v1026 = vand.u32 %v1025, 4294901760
        %v1027 = vsub.f32 %v1025, %v1026
        %v1028 = vand.u32 %v1027, 4294901760
        %1029 = vmatmul.mubr.f32.gmra.mrb[0].mxu0 %v1028
        %v1030 = vpop.f32.mrb[0].mxu0
        %v1031 = vadd.f32 0.0, %v1030
        %v1032 = vpop.f32.mrb[0].mxu0
        %1033 = vmatprep.mubr.f32.mxu0 0.0
        %v1034 = vand.u32 %v883, 4294901760
        %v1035 = vsub.f32 %v883, %v1034
        %v1036 = vand.u32 %v1035, 4294901760
        %v1037 = vsub.f32 %v1035, %v1036
        %v1038 = vand.u32 %v1037, 4294901760
        %1039 = vmatmul.mubr.f32.gmra.mrb[0].mxu0 %v1038
        %v1040 = vpop.f32.mrb[0].mxu0
        %v1041 = vadd.f32 0.0, %v1040
        %v1042 = vpop.f32.mrb[0].mxu0
        %1043 = vmatprep.mubr.f32.mxu0 0.0
        %v1044 = vand.u32 %v884, 4294901760
        %v1045 = vsub.f32 %v884, %v1044
        %v1046 = vand.u32 %v1045, 4294901760
        %v1047 = vsub.f32 %v1045, %v1046
        %v1048 = vand.u32 %v1047, 4294901760
        %1049 = vmatmul.mubr.f32.gmra.mrb[0].mxu0 %v1048
        %v1050 = vpop.f32.mrb[0].mxu0
        %v1051 = vadd.f32 0.0, %v1050
        %v1052 = vpop.f32.mrb[0].mxu0
        %1053 = vmatprep.mubr.f32.mxu0 0.0
        %v1054 = vand.u32 %v885, 4294901760
        %v1055 = vsub.f32 %v885, %v1054
        %v1056 = vand.u32 %v1055, 4294901760
        %v1057 = vsub.f32 %v1055, %v1056
        %v1058 = vand.u32 %v1057, 4294901760
        %1059 = vmatmul.mubr.f32.gmra.mrb[0].mxu0 %v1058
        %v1060 = vpop.f32.mrb[0].mxu0
        %v1061 = vadd.f32 0.0, %v1060
        %v1062 = vpop.f32.mrb[0].mxu0
        %1063 = vmatprep.mubr.f32.mxu0 0.0
        %v1064 = vand.u32 %v886, 4294901760
        %v1065 = vsub.f32 %v886, %v1064
        %v1066 = vand.u32 %v1065, 4294901760
        %v1067 = vsub.f32 %v1065, %v1066
        %v1068 = vand.u32 %v1067, 4294901760
        %1069 = vmatmul.mubr.f32.gmra.mrb[0].mxu0 %v1068
        %v1070 = vpop.f32.mrb[0].mxu0
        %v1071 = vadd.f32 0.0, %v1070
        %v1072 = vpop.f32.mrb[0].mxu0
        %1073 = vmatprep.mubr.f32.mxu0 0.0
        %v1074 = vand.u32 %v887, 4294901760
        %v1075 = vsub.f32 %v887, %v1074
        %v1076 = vand.u32 %v1075, 4294901760
        %v1077 = vsub.f32 %v1075, %v1076
        %v1078 = vand.u32 %v1077, 4294901760
        %1079 = vmatmul.mubr.f32.gmra.mrb[0].mxu0 %v1078
        %v1080 = vpop.f32.mrb[0].mxu0
        %v1081 = vadd.f32 0.0, %v1080
        %v1082 = vpop.f32.mrb[0].mxu0
        %1083 = vmatprep.mubr.f32.mxu0 0.0
        %v1084 = vand.u32 %v888, 4294901760
        %v1085 = vsub.f32 %v888, %v1084
        %v1086 = vand.u32 %v1085, 4294901760
        %v1087 = vsub.f32 %v1085, %v1086
        %v1088 = vand.u32 %v1087, 4294901760
        %1089 = vmatmul.mubr.f32.gmra.mrb[0].mxu0 %v1088
        %v1090 = vpop.f32.mrb[0].mxu0
        %v1091 = vadd.f32 0.0, %v1090
        %v1092 = vpop.f32.mrb[0].mxu0
        %1093 = vmatprep.mubr.f32.mxu0 0.0
        %v1094 = vand.u32 %v889, 4294901760
        %v1095 = vsub.f32 %v889, %v1094
        %v1096 = vand.u32 %v1095, 4294901760
        %v1097 = vsub.f32 %v1095, %v1096
        %v1098 = vand.u32 %v1097, 4294901760
        %1099 = vmatmul.mubr.f32.gmra.mrb[0].mxu0 %v1098
        %v1100 = vpop.f32.mrb[0].mxu0
        %v1101 = vadd.f32 0.0, %v1100
        %v1102 = vpop.f32.mrb[0].mxu0
        %1103 = vmatprep.mubr.f32.mxu0 0.0
        %v1104 = vand.u32 %v890, 4294901760
        %v1105 = vsub.f32 %v890, %v1104
        %v1106 = vand.u32 %v1105, 4294901760
        %v1107 = vsub.f32 %v1105, %v1106
        %v1108 = vand.u32 %v1107, 4294901760
        %1109 = vmatmul.mubr.f32.gmra.mrb[0].mxu0 %v1108
        %v1110 = vpop.f32.mrb[0].mxu0
        %v1111 = vadd.f32 0.0, %v1110
        %v1112 = vpop.f32.mrb[0].mxu0
        %1113 = vmatprep.mubr.f32.mxu0 0.0
        %v1114 = vand.u32 %v891, 4294901760
        %v1115 = vsub.f32 %v891, %v1114
        %v1116 = vand.u32 %v1115, 4294901760
        %v1117 = vsub.f32 %v1115, %v1116
        %v1118 = vand.u32 %v1117, 4294901760
        %1119 = vmatmul.mubr.f32.gmra.mrb[0].mxu0 %v1118
        %v1120 = vpop.f32.mrb[0].mxu0
        %v1121 = vadd.f32 0.0, %v1120
        %v1122 = vpop.f32.mrb[0].mxu0
        %1123 = vmatprep.mubr.f32.mxu0 0.0
        %v1124 = vand.u32 %v892, 4294901760
        %v1125 = vsub.f32 %v892, %v1124
        %v1126 = vand.u32 %v1125, 4294901760
        %v1127 = vsub.f32 %v1125, %v1126
        %v1128 = vand.u32 %v1127, 4294901760
        %1129 = vmatmul.mubr.f32.gmra.mrb[0].mxu0 %v1128
        %v1130 = vpop.f32.mrb[0].mxu0
        %v1131 = vadd.f32 0.0, %v1130
        %v1132 = vpop.f32.mrb[0].mxu0
        %1133 = vdwg.mxu0
        %1134 = vmatprep.subr.mxu0 0.0
        %v1135 = vand.u32 %v214, 4294901760
        %v1136 = vsub.f32 %v214, %v1135
        %v1137 = vand.u32 %v1136, 4294901760
        %v1138 = vsub.f32 %v1136, %v1137
        %v1139 = vand.u32 %v1138, 4294901760
        %1140 = vmatpush1.msra.mxu0 %v1139
        %1141 = vmatprep.subr.mxu0 0.0
        %v1142 = vand.u32 %v215, 4294901760
        %v1143 = vsub.f32 %v215, %v1142
        %v1144 = vand.u32 %v1143, 4294901760
        %v1145 = vsub.f32 %v1143, %v1144
        %v1146 = vand.u32 %v1145, 4294901760
        %1147 = vmatpush1.msra.mxu0 %v1146
        %1148 = vmatprep.subr.mxu0 0.0
        %v1149 = vand.u32 %v216, 4294901760
        %v1150 = vsub.f32 %v216, %v1149
        %v1151 = vand.u32 %v1150, 4294901760
        %v1152 = vsub.f32 %v1150, %v1151
        %v1153 = vand.u32 %v1152, 4294901760
        %1154 = vmatpush1.msra.mxu0 %v1153
        %1155 = vmatprep.subr.mxu0 0.0
        %v1156 = vand.u32 %v217, 4294901760
        %v1157 = vsub.f32 %v217, %v1156
        %v1158 = vand.u32 %v1157, 4294901760
        %v1159 = vsub.f32 %v1157, %v1158
        %v1160 = vand.u32 %v1159, 4294901760
        %1161 = vmatpush1.msra.mxu0 %v1160
        %1162 = vmatprep.subr.mxu0 0.0
        %v1163 = vand.u32 %v218, 4294901760
        %v1164 = vsub.f32 %v218, %v1163
        %v1165 = vand.u32 %v1164, 4294901760
        %v1166 = vsub.f32 %v1164, %v1165
        %v1167 = vand.u32 %v1166, 4294901760
        %1168 = vmatpush1.msra.mxu0 %v1167
        %1169 = vmatprep.subr.mxu0 0.0
        %v1170 = vand.u32 %v219, 4294901760
        %v1171 = vsub.f32 %v219, %v1170
        %v1172 = vand.u32 %v1171, 4294901760
        %v1173 = vsub.f32 %v1171, %v1172
        %v1174 = vand.u32 %v1173, 4294901760
        %1175 = vmatpush1.msra.mxu0 %v1174
        %1176 = vmatprep.subr.mxu0 0.0
        %v1177 = vand.u32 %v220, 4294901760
        %v1178 = vsub.f32 %v220, %v1177
        %v1179 = vand.u32 %v1178, 4294901760
        %v1180 = vsub.f32 %v1178, %v1179
        %v1181 = vand.u32 %v1180, 4294901760
        %1182 = vmatpush1.msra.mxu0 %v1181
        %1183 = vmatprep.subr.mxu0 0.0
        %v1184 = vand.u32 %v221, 4294901760
        %v1185 = vsub.f32 %v221, %v1184
        %v1186 = vand.u32 %v1185, 4294901760
        %v1187 = vsub.f32 %v1185, %v1186
        %v1188 = vand.u32 %v1187, 4294901760
        %1189 = vmatpush1.msra.mxu0 %v1188
        %1190 = vmatprep.subr.mxu0 0.0
        %v1191 = vand.u32 %v222, 4294901760
        %v1192 = vsub.f32 %v222, %v1191
        %v1193 = vand.u32 %v1192, 4294901760
        %v1194 = vsub.f32 %v1192, %v1193
        %v1195 = vand.u32 %v1194, 4294901760
        %1196 = vmatpush1.msra.mxu0 %v1195
        %1197 = vmatprep.subr.mxu0 0.0
        %v1198 = vand.u32 %v223, 4294901760
        %v1199 = vsub.f32 %v223, %v1198
        %v1200 = vand.u32 %v1199, 4294901760
        %v1201 = vsub.f32 %v1199, %v1200
        %v1202 = vand.u32 %v1201, 4294901760
        %1203 = vmatpush1.msra.mxu0 %v1202
        %1204 = vmatprep.subr.mxu0 0.0
        %v1205 = vand.u32 %v224, 4294901760
        %v1206 = vsub.f32 %v224, %v1205
        %v1207 = vand.u32 %v1206, 4294901760
        %v1208 = vsub.f32 %v1206, %v1207
        %v1209 = vand.u32 %v1208, 4294901760
        %1210 = vmatpush1.msra.mxu0 %v1209
        %1211 = vmatprep.subr.mxu0 0.0
        %v1212 = vand.u32 %v225, 4294901760
        %v1213 = vsub.f32 %v225, %v1212
        %v1214 = vand.u32 %v1213, 4294901760
        %v1215 = vsub.f32 %v1213, %v1214
        %v1216 = vand.u32 %v1215, 4294901760
        %1217 = vmatpush1.msra.mxu0 %v1216
        %1218 = vmatprep.subr.mxu0 0.0
        %v1219 = vand.u32 %v226, 4294901760
        %v1220 = vsub.f32 %v226, %v1219
        %v1221 = vand.u32 %v1220, 4294901760
        %v1222 = vsub.f32 %v1220, %v1221
        %v1223 = vand.u32 %v1222, 4294901760
        %1224 = vmatpush1.msra.mxu0 %v1223
        %1225 = vmatprep.subr.mxu0 0.0
        %v1226 = vand.u32 %v227, 4294901760
        %v1227 = vsub.f32 %v227, %v1226
        %v1228 = vand.u32 %v1227, 4294901760
        %v1229 = vsub.f32 %v1227, %v1228
        %v1230 = vand.u32 %v1229, 4294901760
        %1231 = vmatpush1.msra.mxu0 %v1230
        %1232 = vmatprep.subr.mxu0 0.0
        %v1233 = vand.u32 %v228, 4294901760
        %v1234 = vsub.f32 %v228, %v1233
        %v1235 = vand.u32 %v1234, 4294901760
        %v1236 = vsub.f32 %v1234, %v1235
        %v1237 = vand.u32 %v1236, 4294901760
        %1238 = vmatpush1.msra.mxu0 %v1237
        %1239 = vmatprep.subr.mxu0 0.0
        %v1240 = vand.u32 %v229, 4294901760
        %v1241 = vsub.f32 %v229, %v1240
        %v1242 = vand.u32 %v1241, 4294901760
        %v1243 = vsub.f32 %v1241, %v1242
        %v1244 = vand.u32 %v1243, 4294901760
        %1245 = vmatpush1.msra.mxu0 %v1244
        %1246 = vmatprep.subr.mxu0 0.0
        %1247 = vmatpush1.msra.mxu0 0.0
        %1248 = vmatprep.subr.mxu0 0.0
        %1249 = vmatpush1.msra.mxu0 0.0
        %1250 = vmatprep.subr.mxu0 0.0
        %1251 = vmatpush1.msra.mxu0 0.0
        %1252 = vmatprep.subr.mxu0 0.0
        %1253 = vmatpush1.msra.mxu0 0.0
        %1254 = vmatprep.subr.mxu0 0.0
        %1255 = vmatpush1.msra.mxu0 0.0
        %1256 = vmatprep.subr.mxu0 0.0
        %1257 = vmatpush1.msra.mxu0 0.0
        %1258 = vmatprep.subr.mxu0 0.0
        %1259 = vmatpush1.msra.mxu0 0.0
        %1260 = vmatprep.subr.mxu0 0.0
        %1261 = vmatpush1.msra.mxu0 0.0
        %1262 = vmatprep.subr.mxu0 0.0
        %1263 = vmatpush1.msra.mxu0 0.0
        %1264 = vmatprep.subr.mxu0 0.0
        %1265 = vmatpush1.msra.mxu0 0.0
        %1266 = vmatprep.subr.mxu0 0.0
        %1267 = vmatpush1.msra.mxu0 0.0
        %1268 = vmatprep.subr.mxu0 0.0
        %1269 = vmatpush1.msra.mxu0 0.0
        %1270 = vmatprep.subr.mxu0 0.0
        %1271 = vmatpush1.msra.mxu0 0.0
        %1272 = vmatprep.subr.mxu0 0.0
        %1273 = vmatpush1.msra.mxu0 0.0
        %1274 = vmatprep.subr.mxu0 0.0
        %1275 = vmatpush1.msra.mxu0 0.0
        %1276 = vmatprep.subr.mxu0 0.0
        %1277 = vmatpush1.msra.mxu0 0.0
        %1278 = vmatprep.mubr.f32.mxu0 0.0
        %v1279 = vand.u32 %v877, 4294901760
        %1280 = vmatmul.mubr.f32.gmra.mrb[0].mxu0 %v1279
        %v1281 = vpop.f32.mrb[0].mxu0
        %v1282 = vadd.f32 %v981, %v1281
        %v1283 = vpop.f32.mrb[0].mxu0
        %1284 = vmatprep.mubr.f32.mxu0 0.0
        %v1285 = vand.u32 %v878, 4294901760
        %1286 = vmatmul.mubr.f32.gmra.mrb[0].mxu0 %v1285
        %v1287 = vpop.f32.mrb[0].mxu0
        %v1288 = vadd.f32 %v991, %v1287
        %v1289 = vpop.f32.mrb[0].mxu0
        %1290 = vmatprep.mubr.f32.mxu0 0.0
        %v1291 = vand.u32 %v879, 4294901760
        %1292 = vmatmul.mubr.f32.gmra.mrb[0].mxu0 %v1291
        %v1293 = vpop.f32.mrb[0].mxu0
        %v1294 = vadd.f32 %v1001, %v1293
        %v1295 = vpop.f32.mrb[0].mxu0
        %1296 = vmatprep.mubr.f32.mxu0 0.0
        %v1297 = vand.u32 %v880, 4294901760
        %1298 = vmatmul.mubr.f32.gmra.mrb[0].mxu0 %v1297
        %v1299 = vpop.f32.mrb[0].mxu0
        %v1300 = vadd.f32 %v1011, %v1299
        %v1301 = vpop.f32.mrb[0].mxu0
        %1302 = vmatprep.mubr.f32.mxu0 0.0
        %v1303 = vand.u32 %v881, 4294901760
        %1304 = vmatmul.mubr.f32.gmra.mrb[0].mxu0 %v1303
        %v1305 = vpop.f32.mrb[0].mxu0
        %v1306 = vadd.f32 %v1021, %v1305
        %v1307 = vpop.f32.mrb[0].mxu0
        %1308 = vmatprep.mubr.f32.mxu0 0.0
        %v1309 = vand.u32 %v882, 4294901760
        %1310 = vmatmul.mubr.f32.gmra.mrb[0].mxu0 %v1309
        %v1311 = vpop.f32.mrb[0].mxu0
        %v1312 = vadd.f32 %v1031, %v1311
        %v1313 = vpop.f32.mrb[0].mxu0
        %1314 = vmatprep.mubr.f32.mxu0 0.0
        %v1315 = vand.u32 %v883, 4294901760
        %1316 = vmatmul.mubr.f32.gmra.mrb[0].mxu0 %v1315
        %v1317 = vpop.f32.mrb[0].mxu0
        %v1318 = vadd.f32 %v1041, %v1317
        %v1319 = vpop.f32.mrb[0].mxu0
        %1320 = vmatprep.mubr.f32.mxu0 0.0
        %v1321 = vand.u32 %v884, 4294901760
        %1322 = vmatmul.mubr.f32.gmra.mrb[0].mxu0 %v1321
        %v1323 = vpop.f32.mrb[0].mxu0
        %v1324 = vadd.f32 %v1051, %v1323
        %v1325 = vpop.f32.mrb[0].mxu0
        %1326 = vmatprep.mubr.f32.mxu0 0.0
        %v1327 = vand.u32 %v885, 4294901760
        %1328 = vmatmul.mubr.f32.gmra.mrb[0].mxu0 %v1327
        %v1329 = vpop.f32.mrb[0].mxu0
        %v1330 = vadd.f32 %v1061, %v1329
        %v1331 = vpop.f32.mrb[0].mxu0
        %1332 = vmatprep.mubr.f32.mxu0 0.0
        %v1333 = vand.u32 %v886, 4294901760
        %1334 = vmatmul.mubr.f32.gmra.mrb[0].mxu0 %v1333
        %v1335 = vpop.f32.mrb[0].mxu0
        %v1336 = vadd.f32 %v1071, %v1335
        %v1337 = vpop.f32.mrb[0].mxu0
        %1338 = vmatprep.mubr.f32.mxu0 0.0
        %v1339 = vand.u32 %v887, 4294901760
        %1340 = vmatmul.mubr.f32.gmra.mrb[0].mxu0 %v1339
        %v1341 = vpop.f32.mrb[0].mxu0
        %v1342 = vadd.f32 %v1081, %v1341
        %v1343 = vpop.f32.mrb[0].mxu0
        %1344 = vmatprep.mubr.f32.mxu0 0.0
        %v1345 = vand.u32 %v888, 4294901760
        %1346 = vmatmul.mubr.f32.gmra.mrb[0].mxu0 %v1345
        %v1347 = vpop.f32.mrb[0].mxu0
        %v1348 = vadd.f32 %v1091, %v1347
        %v1349 = vpop.f32.mrb[0].mxu0
        %1350 = vmatprep.mubr.f32.mxu0 0.0
        %v1351 = vand.u32 %v889, 4294901760
        %1352 = vmatmul.mubr.f32.gmra.mrb[0].mxu0 %v1351
        %v1353 = vpop.f32.mrb[0].mxu0
        %v1354 = vadd.f32 %v1101, %v1353
        %v1355 = vpop.f32.mrb[0].mxu0
        %1356 = vmatprep.mubr.f32.mxu0 0.0
        %v1357 = vand.u32 %v890, 4294901760
        %1358 = vmatmul.mubr.f32.gmra.mrb[0].mxu0 %v1357
        %v1359 = vpop.f32.mrb[0].mxu0
        %v1360 = vadd.f32 %v1111, %v1359
        %v1361 = vpop.f32.mrb[0].mxu0
        %1362 = vmatprep.mubr.f32.mxu0 0.0
        %v1363 = vand.u32 %v891, 4294901760
        %1364 = vmatmul.mubr.f32.gmra.mrb[0].mxu0 %v1363
        %v1365 = vpop.f32.mrb[0].mxu0
        %v1366 = vadd.f32 %v1121, %v1365
        %v1367 = vpop.f32.mrb[0].mxu0
        %1368 = vmatprep.mubr.f32.mxu0 0.0
        %v1369 = vand.u32 %v892, 4294901760
        %1370 = vmatmul.mubr.f32.gmra.mrb[0].mxu0 %v1369
        %v1371 = vpop.f32.mrb[0].mxu0
        %v1372 = vadd.f32 %v1131, %v1371
        %v1373 = vpop.f32.mrb[0].mxu0
        %1374 = vdwg.mxu0
        %1375 = vmatprep.subr.mxu0 0.0
        %v1376 = vand.u32 %v214, 4294901760
        %v1377 = vsub.f32 %v214, %v1376
        %1378 = vmatpush1.msra.mxu0 %v1377
        %1379 = vmatprep.subr.mxu0 0.0
        %v1380 = vand.u32 %v215, 4294901760
        %v1381 = vsub.f32 %v215, %v1380
        %1382 = vmatpush1.msra.mxu0 %v1381
        %1383 = vmatprep.subr.mxu0 0.0
        %v1384 = vand.u32 %v216, 4294901760
        %v1385 = vsub.f32 %v216, %v1384
        %1386 = vmatpush1.msra.mxu0 %v1385
        %1387 = vmatprep.subr.mxu0 0.0
        %v1388 = vand.u32 %v217, 4294901760
        %v1389 = vsub.f32 %v217, %v1388
        %1390 = vmatpush1.msra.mxu0 %v1389
        %1391 = vmatprep.subr.mxu0 0.0
        %v1392 = vand.u32 %v218, 4294901760
        %v1393 = vsub.f32 %v218, %v1392
        %1394 = vmatpush1.msra.mxu0 %v1393
        %1395 = vmatprep.subr.mxu0 0.0
        %v1396 = vand.u32 %v219, 4294901760
        %v1397 = vsub.f32 %v219, %v1396
        %1398 = vmatpush1.msra.mxu0 %v1397
        %1399 = vmatprep.subr.mxu0 0.0
        %v1400 = vand.u32 %v220, 4294901760
        %v1401 = vsub.f32 %v220, %v1400
        %1402 = vmatpush1.msra.mxu0 %v1401
        %1403 = vmatprep.subr.mxu0 0.0
        %v1404 = vand.u32 %v221, 4294901760
        %v1405 = vsub.f32 %v221, %v1404
        %1406 = vmatpush1.msra.mxu0 %v1405
        %1407 = vmatprep.subr.mxu0 0.0
        %v1408 = vand.u32 %v222, 4294901760
        %v1409 = vsub.f32 %v222, %v1408
        %1410 = vmatpush1.msra.mxu0 %v1409
        %1411 = vmatprep.subr.mxu0 0.0
        %v1412 = vand.u32 %v223, 4294901760
        %v1413 = vsub.f32 %v223, %v1412
        %1414 = vmatpush1.msra.mxu0 %v1413
        %1415 = vmatprep.subr.mxu0 0.0
        %v1416 = vand.u32 %v224, 4294901760
        %v1417 = vsub.f32 %v224, %v1416
        %1418 = vmatpush1.msra.mxu0 %v1417
        %1419 = vmatprep.subr.mxu0 0.0
        %v1420 = vand.u32 %v225, 4294901760
        %v1421 = vsub.f32 %v225, %v1420
        %1422 = vmatpush1.msra.mxu0 %v1421
        %1423 = vmatprep.subr.mxu0 0.0
        %v1424 = vand.u32 %v226, 4294901760
        %v1425 = vsub.f32 %v226, %v1424
        %1426 = vmatpush1.msra.mxu0 %v1425
        %1427 = vmatprep.subr.mxu0 0.0
        %v1428 = vand.u32 %v227, 4294901760
        %v1429 = vsub.f32 %v227, %v1428
        %1430 = vmatpush1.msra.mxu0 %v1429
        %1431 = vmatprep.subr.mxu0 0.0
        %v1432 = vand.u32 %v228, 4294901760
        %v1433 = vsub.f32 %v228, %v1432
        %1434 = vmatpush1.msra.mxu0 %v1433
        %1435 = vmatprep.subr.mxu0 0.0
        %v1436 = vand.u32 %v229, 4294901760
        %v1437 = vsub.f32 %v229, %v1436
        %1438 = vmatpush1.msra.mxu0 %v1437
        %1439 = vmatprep.subr.mxu0 0.0
        %1440 = vmatpush1.msra.mxu0 0.0
        %1441 = vmatprep.subr.mxu0 0.0
        %1442 = vmatpush1.msra.mxu0 0.0
        %1443 = vmatprep.subr.mxu0 0.0
        %1444 = vmatpush1.msra.mxu0 0.0
        %1445 = vmatprep.subr.mxu0 0.0
        %1446 = vmatpush1.msra.mxu0 0.0
        %1447 = vmatprep.subr.mxu0 0.0
        %1448 = vmatpush1.msra.mxu0 0.0
        %1449 = vmatprep.subr.mxu0 0.0
        %1450 = vmatpush1.msra.mxu0 0.0
        %1451 = vmatprep.subr.mxu0 0.0
        %1452 = vmatpush1.msra.mxu0 0.0
        %1453 = vmatprep.subr.mxu0 0.0
        %1454 = vmatpush1.msra.mxu0 0.0
        %1455 = vmatprep.subr.mxu0 0.0
        %1456 = vmatpush1.msra.mxu0 0.0
        %1457 = vmatprep.subr.mxu0 0.0
        %1458 = vmatpush1.msra.mxu0 0.0
        %1459 = vmatprep.subr.mxu0 0.0
        %1460 = vmatpush1.msra.mxu0 0.0
        %1461 = vmatprep.subr.mxu0 0.0
        %1462 = vmatpush1.msra.mxu0 0.0
        %1463 = vmatprep.subr.mxu0 0.0
        %1464 = vmatpush1.msra.mxu0 0.0
        %1465 = vmatprep.subr.mxu0 0.0
        %1466 = vmatpush1.msra.mxu0 0.0
        %1467 = vmatprep.subr.mxu0 0.0
        %1468 = vmatpush1.msra.mxu0 0.0
        %1469 = vmatprep.subr.mxu0 0.0
        %1470 = vmatpush1.msra.mxu0 0.0
        %1471 = vmatprep.mubr.f32.mxu0 0.0
        %v1472 = vand.u32 %v877, 4294901760
        %v1473 = vsub.f32 %v877, %v1472
        %1474 = vmatmul.mubr.f32.gmra.mrb[0].mxu0 %v1473
        %v1475 = vpop.f32.mrb[0].mxu0
        %v1476 = vadd.f32 %v1282, %v1475
        %v1477 = vpop.f32.mrb[0].mxu0
        %1478 = vmatprep.mubr.f32.mxu0 0.0
        %v1479 = vand.u32 %v878, 4294901760
        %v1480 = vsub.f32 %v878, %v1479
        %1481 = vmatmul.mubr.f32.gmra.mrb[0].mxu0 %v1480
        %v1482 = vpop.f32.mrb[0].mxu0
        %v1483 = vadd.f32 %v1288, %v1482
        %v1484 = vpop.f32.mrb[0].mxu0
        %1485 = vmatprep.mubr.f32.mxu0 0.0
        %v1486 = vand.u32 %v879, 4294901760
        %v1487 = vsub.f32 %v879, %v1486
        %1488 = vmatmul.mubr.f32.gmra.mrb[0].mxu0 %v1487
        %v1489 = vpop.f32.mrb[0].mxu0
        %v1490 = vadd.f32 %v1294, %v1489
        %v1491 = vpop.f32.mrb[0].mxu0
        %1492 = vmatprep.mubr.f32.mxu0 0.0
        %v1493 = vand.u32 %v880, 4294901760
        %v1494 = vsub.f32 %v880, %v1493
        %1495 = vmatmul.mubr.f32.gmra.mrb[0].mxu0 %v1494
        %v1496 = vpop.f32.mrb[0].mxu0
        %v1497 = vadd.f32 %v1300, %v1496
        %v1498 = vpop.f32.mrb[0].mxu0
        %1499 = vmatprep.mubr.f32.mxu0 0.0
        %v1500 = vand.u32 %v881, 4294901760
        %v1501 = vsub.f32 %v881, %v1500
        %1502 = vmatmul.mubr.f32.gmra.mrb[0].mxu0 %v1501
        %v1503 = vpop.f32.mrb[0].mxu0
        %v1504 = vadd.f32 %v1306, %v1503
        %v1505 = vpop.f32.mrb[0].mxu0
        %1506 = vmatprep.mubr.f32.mxu0 0.0
        %v1507 = vand.u32 %v882, 4294901760
        %v1508 = vsub.f32 %v882, %v1507
        %1509 = vmatmul.mubr.f32.gmra.mrb[0].mxu0 %v1508
        %v1510 = vpop.f32.mrb[0].mxu0
        %v1511 = vadd.f32 %v1312, %v1510
        %v1512 = vpop.f32.mrb[0].mxu0
        %1513 = vmatprep.mubr.f32.mxu0 0.0
        %v1514 = vand.u32 %v883, 4294901760
        %v1515 = vsub.f32 %v883, %v1514
        %1516 = vmatmul.mubr.f32.gmra.mrb[0].mxu0 %v1515
        %v1517 = vpop.f32.mrb[0].mxu0
        %v1518 = vadd.f32 %v1318, %v1517
        %v1519 = vpop.f32.mrb[0].mxu0
        %1520 = vmatprep.mubr.f32.mxu0 0.0
        %v1521 = vand.u32 %v884, 4294901760
        %v1522 = vsub.f32 %v884, %v1521
        %1523 = vmatmul.mubr.f32.gmra.mrb[0].mxu0 %v1522
        %v1524 = vpop.f32.mrb[0].mxu0
        %v1525 = vadd.f32 %v1324, %v1524
        %v1526 = vpop.f32.mrb[0].mxu0
        %1527 = vmatprep.mubr.f32.mxu0 0.0
        %v1528 = vand.u32 %v885, 4294901760
        %v1529 = vsub.f32 %v885, %v1528
        %1530 = vmatmul.mubr.f32.gmra.mrb[0].mxu0 %v1529
        %v1531 = vpop.f32.mrb[0].mxu0
        %v1532 = vadd.f32 %v1330, %v1531
        %v1533 = vpop.f32.mrb[0].mxu0
        %1534 = vmatprep.mubr.f32.mxu0 0.0
        %v1535 = vand.u32 %v886, 4294901760
        %v1536 = vsub.f32 %v886, %v1535
        %1537 = vmatmul.mubr.f32.gmra.mrb[0].mxu0 %v1536
        %v1538 = vpop.f32.mrb[0].mxu0
        %v1539 = vadd.f32 %v1336, %v1538
        %v1540 = vpop.f32.mrb[0].mxu0
        %1541 = vmatprep.mubr.f32.mxu0 0.0
        %v1542 = vand.u32 %v887, 4294901760
        %v1543 = vsub.f32 %v887, %v1542
        %1544 = vmatmul.mubr.f32.gmra.mrb[0].mxu0 %v1543
        %v1545 = vpop.f32.mrb[0].mxu0
        %v1546 = vadd.f32 %v1342, %v1545
        %v1547 = vpop.f32.mrb[0].mxu0
        %1548 = vmatprep.mubr.f32.mxu0 0.0
        %v1549 = vand.u32 %v888, 4294901760
        %v1550 = vsub.f32 %v888, %v1549
        %1551 = vmatmul.mubr.f32.gmra.mrb[0].mxu0 %v1550
        %v1552 = vpop.f32.mrb[0].mxu0
        %v1553 = vadd.f32 %v1348, %v1552
        %v1554 = vpop.f32.mrb[0].mxu0
        %1555 = vmatprep.mubr.f32.mxu0 0.0
        %v1556 = vand.u32 %v889, 4294901760
        %v1557 = vsub.f32 %v889, %v1556
        %1558 = vmatmul.mubr.f32.gmra.mrb[0].mxu0 %v1557
        %v1559 = vpop.f32.mrb[0].mxu0
        %v1560 = vadd.f32 %v1354, %v1559
        %v1561 = vpop.f32.mrb[0].mxu0
        %1562 = vmatprep.mubr.f32.mxu0 0.0
        %v1563 = vand.u32 %v890, 4294901760
        %v1564 = vsub.f32 %v890, %v1563
        %1565 = vmatmul.mubr.f32.gmra.mrb[0].mxu0 %v1564
        %v1566 = vpop.f32.mrb[0].mxu0
        %v1567 = vadd.f32 %v1360, %v1566
        %v1568 = vpop.f32.mrb[0].mxu0
        %1569 = vmatprep.mubr.f32.mxu0 0.0
        %v1570 = vand.u32 %v891, 4294901760
        %v1571 = vsub.f32 %v891, %v1570
        %1572 = vmatmul.mubr.f32.gmra.mrb[0].mxu0 %v1571
        %v1573 = vpop.f32.mrb[0].mxu0
        %v1574 = vadd.f32 %v1366, %v1573
        %v1575 = vpop.f32.mrb[0].mxu0
        %1576 = vmatprep.mubr.f32.mxu0 0.0
        %v1577 = vand.u32 %v892, 4294901760
        %v1578 = vsub.f32 %v892, %v1577
        %1579 = vmatmul.mubr.f32.gmra.mrb[0].mxu0 %v1578
        %v1580 = vpop.f32.mrb[0].mxu0
        %v1581 = vadd.f32 %v1372, %v1580
        %v1582 = vpop.f32.mrb[0].mxu0
        %1583 = vdwg.mxu0
        %1584 = vmatprep.subr.mxu0 0.0
        %v1585 = vand.u32 %v214, 4294901760
        %1586 = vmatpush1.msra.mxu0 %v1585
        %1587 = vmatprep.subr.mxu0 0.0
        %v1588 = vand.u32 %v215, 4294901760
        %1589 = vmatpush1.msra.mxu0 %v1588
        %1590 = vmatprep.subr.mxu0 0.0
        %v1591 = vand.u32 %v216, 4294901760
        %1592 = vmatpush1.msra.mxu0 %v1591
        %1593 = vmatprep.subr.mxu0 0.0
        %v1594 = vand.u32 %v217, 4294901760
        %1595 = vmatpush1.msra.mxu0 %v1594
        %1596 = vmatprep.subr.mxu0 0.0
        %v1597 = vand.u32 %v218, 4294901760
        %1598 = vmatpush1.msra.mxu0 %v1597
        %1599 = vmatprep.subr.mxu0 0.0
        %v1600 = vand.u32 %v219, 4294901760
        %1601 = vmatpush1.msra.mxu0 %v1600
        %1602 = vmatprep.subr.mxu0 0.0
        %v1603 = vand.u32 %v220, 4294901760
        %1604 = vmatpush1.msra.mxu0 %v1603
        %1605 = vmatprep.subr.mxu0 0.0
        %v1606 = vand.u32 %v221, 4294901760
        %1607 = vmatpush1.msra.mxu0 %v1606
        %1608 = vmatprep.subr.mxu0 0.0
        %v1609 = vand.u32 %v222, 4294901760
        %1610 = vmatpush1.msra.mxu0 %v1609
        %1611 = vmatprep.subr.mxu0 0.0
        %v1612 = vand.u32 %v223, 4294901760
        %1613 = vmatpush1.msra.mxu0 %v1612
        %1614 = vmatprep.subr.mxu0 0.0
        %v1615 = vand.u32 %v224, 4294901760
        %1616 = vmatpush1.msra.mxu0 %v1615
        %1617 = vmatprep.subr.mxu0 0.0
        %v1618 = vand.u32 %v225, 4294901760
        %1619 = vmatpush1.msra.mxu0 %v1618
        %1620 = vmatprep.subr.mxu0 0.0
        %v1621 = vand.u32 %v226, 4294901760
        %1622 = vmatpush1.msra.mxu0 %v1621
        %1623 = vmatprep.subr.mxu0 0.0
        %v1624 = vand.u32 %v227, 4294901760
        %1625 = vmatpush1.msra.mxu0 %v1624
        %1626 = vmatprep.subr.mxu0 0.0
        %v1627 = vand.u32 %v228, 4294901760
        %1628 = vmatpush1.msra.mxu0 %v1627
        %1629 = vmatprep.subr.mxu0 0.0
        %v1630 = vand.u32 %v229, 4294901760
        %1631 = vmatpush1.msra.mxu0 %v1630
        %1632 = vmatprep.subr.mxu0 0.0
        %1633 = vmatpush1.msra.mxu0 0.0
        %1634 = vmatprep.subr.mxu0 0.0
        %1635 = vmatpush1.msra.mxu0 0.0
        %1636 = vmatprep.subr.mxu0 0.0
        %1637 = vmatpush1.msra.mxu0 0.0
        %1638 = vmatprep.subr.mxu0 0.0
        %1639 = vmatpush1.msra.mxu0 0.0
        %1640 = vmatprep.subr.mxu0 0.0
        %1641 = vmatpush1.msra.mxu0 0.0
        %1642 = vmatprep.subr.mxu0 0.0
        %1643 = vmatpush1.msra.mxu0 0.0
        %1644 = vmatprep.subr.mxu0 0.0
        %1645 = vmatpush1.msra.mxu0 0.0
        %1646 = vmatprep.subr.mxu0 0.0
        %1647 = vmatpush1.msra.mxu0 0.0
        %1648 = vmatprep.subr.mxu0 0.0
        %1649 = vmatpush1.msra.mxu0 0.0
        %1650 = vmatprep.subr.mxu0 0.0
        %1651 = vmatpush1.msra.mxu0 0.0
        %1652 = vmatprep.subr.mxu0 0.0
        %1653 = vmatpush1.msra.mxu0 0.0
        %1654 = vmatprep.subr.mxu0 0.0
        %1655 = vmatpush1.msra.mxu0 0.0
        %1656 = vmatprep.subr.mxu0 0.0
        %1657 = vmatpush1.msra.mxu0 0.0
        %1658 = vmatprep.subr.mxu0 0.0
        %1659 = vmatpush1.msra.mxu0 0.0
        %1660 = vmatprep.subr.mxu0 0.0
        %1661 = vmatpush1.msra.mxu0 0.0
        %1662 = vmatprep.subr.mxu0 0.0
        %1663 = vmatpush1.msra.mxu0 0.0
        %1664 = vmatprep.mubr.f32.mxu0 0.0
        %v1665 = vand.u32 %v877, 4294901760
        %v1666 = vsub.f32 %v877, %v1665
        %v1667 = vand.u32 %v1666, 4294901760
        %1668 = vmatmul.mubr.f32.gmra.mrb[0].mxu0 %v1667
        %v1669 = vpop.f32.mrb[0].mxu0
        %v1670 = vadd.f32 %v1476, %v1669
        %v1671 = vpop.f32.mrb[0].mxu0
        %1672 = vmatprep.mubr.f32.mxu0 0.0
        %v1673 = vand.u32 %v878, 4294901760
        %v1674 = vsub.f32 %v878, %v1673
        %v1675 = vand.u32 %v1674, 4294901760
        %1676 = vmatmul.mubr.f32.gmra.mrb[0].mxu0 %v1675
        %v1677 = vpop.f32.mrb[0].mxu0
        %v1678 = vadd.f32 %v1483, %v1677
        %v1679 = vpop.f32.mrb[0].mxu0
        %1680 = vmatprep.mubr.f32.mxu0 0.0
        %v1681 = vand.u32 %v879, 4294901760
        %v1682 = vsub.f32 %v879, %v1681
        %v1683 = vand.u32 %v1682, 4294901760
        %1684 = vmatmul.mubr.f32.gmra.mrb[0].mxu0 %v1683
        %v1685 = vpop.f32.mrb[0].mxu0
        %v1686 = vadd.f32 %v1490, %v1685
        %v1687 = vpop.f32.mrb[0].mxu0
        %1688 = vmatprep.mubr.f32.mxu0 0.0
        %v1689 = vand.u32 %v880, 4294901760
        %v1690 = vsub.f32 %v880, %v1689
        %v1691 = vand.u32 %v1690, 4294901760
        %1692 = vmatmul.mubr.f32.gmra.mrb[0].mxu0 %v1691
        %v1693 = vpop.f32.mrb[0].mxu0
        %v1694 = vadd.f32 %v1497, %v1693
        %v1695 = vpop.f32.mrb[0].mxu0
        %1696 = vmatprep.mubr.f32.mxu0 0.0
        %v1697 = vand.u32 %v881, 4294901760
        %v1698 = vsub.f32 %v881, %v1697
        %v1699 = vand.u32 %v1698, 4294901760
        %1700 = vmatmul.mubr.f32.gmra.mrb[0].mxu0 %v1699
        %v1701 = vpop.f32.mrb[0].mxu0
        %v1702 = vadd.f32 %v1504, %v1701
        %v1703 = vpop.f32.mrb[0].mxu0
        %1704 = vmatprep.mubr.f32.mxu0 0.0
        %v1705 = vand.u32 %v882, 4294901760
        %v1706 = vsub.f32 %v882, %v1705
        %v1707 = vand.u32 %v1706, 4294901760
        %1708 = vmatmul.mubr.f32.gmra.mrb[0].mxu0 %v1707
        %v1709 = vpop.f32.mrb[0].mxu0
        %v1710 = vadd.f32 %v1511, %v1709
        %v1711 = vpop.f32.mrb[0].mxu0
        %1712 = vmatprep.mubr.f32.mxu0 0.0
        %v1713 = vand.u32 %v883, 4294901760
        %v1714 = vsub.f32 %v883, %v1713
        %v1715 = vand.u32 %v1714, 4294901760
        %1716 = vmatmul.mubr.f32.gmra.mrb[0].mxu0 %v1715
        %v1717 = vpop.f32.mrb[0].mxu0
        %v1718 = vadd.f32 %v1518, %v1717
        %v1719 = vpop.f32.mrb[0].mxu0
        %1720 = vmatprep.mubr.f32.mxu0 0.0
        %v1721 = vand.u32 %v884, 4294901760
        %v1722 = vsub.f32 %v884, %v1721
        %v1723 = vand.u32 %v1722, 4294901760
        %1724 = vmatmul.mubr.f32.gmra.mrb[0].mxu0 %v1723
        %v1725 = vpop.f32.mrb[0].mxu0
        %v1726 = vadd.f32 %v1525, %v1725
        %v1727 = vpop.f32.mrb[0].mxu0
        %1728 = vmatprep.mubr.f32.mxu0 0.0
        %v1729 = vand.u32 %v885, 4294901760
        %v1730 = vsub.f32 %v885, %v1729
        %v1731 = vand.u32 %v1730, 4294901760
        %1732 = vmatmul.mubr.f32.gmra.mrb[0].mxu0 %v1731
        %v1733 = vpop.f32.mrb[0].mxu0
        %v1734 = vadd.f32 %v1532, %v1733
        %v1735 = vpop.f32.mrb[0].mxu0
        %1736 = vmatprep.mubr.f32.mxu0 0.0
        %v1737 = vand.u32 %v886, 4294901760
        %v1738 = vsub.f32 %v886, %v1737
        %v1739 = vand.u32 %v1738, 4294901760
        %1740 = vmatmul.mubr.f32.gmra.mrb[0].mxu0 %v1739
        %v1741 = vpop.f32.mrb[0].mxu0
        %v1742 = vadd.f32 %v1539, %v1741
        %v1743 = vpop.f32.mrb[0].mxu0
        %1744 = vmatprep.mubr.f32.mxu0 0.0
        %v1745 = vand.u32 %v887, 4294901760
        %v1746 = vsub.f32 %v887, %v1745
        %v1747 = vand.u32 %v1746, 4294901760
        %1748 = vmatmul.mubr.f32.gmra.mrb[0].mxu0 %v1747
        %v1749 = vpop.f32.mrb[0].mxu0
        %v1750 = vadd.f32 %v1546, %v1749
        %v1751 = vpop.f32.mrb[0].mxu0
        %1752 = vmatprep.mubr.f32.mxu0 0.0
        %v1753 = vand.u32 %v888, 4294901760
        %v1754 = vsub.f32 %v888, %v1753
        %v1755 = vand.u32 %v1754, 4294901760
        %1756 = vmatmul.mubr.f32.gmra.mrb[0].mxu0 %v1755
        %v1757 = vpop.f32.mrb[0].mxu0
        %v1758 = vadd.f32 %v1553, %v1757
        %v1759 = vpop.f32.mrb[0].mxu0
        %1760 = vmatprep.mubr.f32.mxu0 0.0
        %v1761 = vand.u32 %v889, 4294901760
        %v1762 = vsub.f32 %v889, %v1761
        %v1763 = vand.u32 %v1762, 4294901760
        %1764 = vmatmul.mubr.f32.gmra.mrb[0].mxu0 %v1763
        %v1765 = vpop.f32.mrb[0].mxu0
        %v1766 = vadd.f32 %v1560, %v1765
        %v1767 = vpop.f32.mrb[0].mxu0
        %1768 = vmatprep.mubr.f32.mxu0 0.0
        %v1769 = vand.u32 %v890, 4294901760
        %v1770 = vsub.f32 %v890, %v1769
        %v1771 = vand.u32 %v1770, 4294901760
        %1772 = vmatmul.mubr.f32.gmra.mrb[0].mxu0 %v1771
        %v1773 = vpop.f32.mrb[0].mxu0
        %v1774 = vadd.f32 %v1567, %v1773
        %v1775 = vpop.f32.mrb[0].mxu0
        %1776 = vmatprep.mubr.f32.mxu0 0.0
        %v1777 = vand.u32 %v891, 4294901760
        %v1778 = vsub.f32 %v891, %v1777
        %v1779 = vand.u32 %v1778, 4294901760
        %1780 = vmatmul.mubr.f32.gmra.mrb[0].mxu0 %v1779
        %v1781 = vpop.f32.mrb[0].mxu0
        %v1782 = vadd.f32 %v1574, %v1781
        %v1783 = vpop.f32.mrb[0].mxu0
        %1784 = vmatprep.mubr.f32.mxu0 0.0
        %v1785 = vand.u32 %v892, 4294901760
        %v1786 = vsub.f32 %v892, %v1785
        %v1787 = vand.u32 %v1786, 4294901760
        %1788 = vmatmul.mubr.f32.gmra.mrb[0].mxu0 %v1787
        %v1789 = vpop.f32.mrb[0].mxu0
        %v1790 = vadd.f32 %v1581, %v1789
        %v1791 = vpop.f32.mrb[0].mxu0
        %1792 = vdwg.mxu0
        %1793 = vmatprep.subr.mxu0 0.0
        %v1794 = vand.u32 %v214, 4294901760
        %v1795 = vsub.f32 %v214, %v1794
        %v1796 = vand.u32 %v1795, 4294901760
        %1797 = vmatpush1.msra.mxu0 %v1796
        %1798 = vmatprep.subr.mxu0 0.0
        %v1799 = vand.u32 %v215, 4294901760
        %v1800 = vsub.f32 %v215, %v1799
        %v1801 = vand.u32 %v1800, 4294901760
        %1802 = vmatpush1.msra.mxu0 %v1801
        %1803 = vmatprep.subr.mxu0 0.0
        %v1804 = vand.u32 %v216, 4294901760
        %v1805 = vsub.f32 %v216, %v1804
        %v1806 = vand.u32 %v1805, 4294901760
        %1807 = vmatpush1.msra.mxu0 %v1806
        %1808 = vmatprep.subr.mxu0 0.0
        %v1809 = vand.u32 %v217, 4294901760
        %v1810 = vsub.f32 %v217, %v1809
        %v1811 = vand.u32 %v1810, 4294901760
        %1812 = vmatpush1.msra.mxu0 %v1811
        %1813 = vmatprep.subr.mxu0 0.0
        %v1814 = vand.u32 %v218, 4294901760
        %v1815 = vsub.f32 %v218, %v1814
        %v1816 = vand.u32 %v1815, 4294901760
        %1817 = vmatpush1.msra.mxu0 %v1816
        %1818 = vmatprep.subr.mxu0 0.0
        %v1819 = vand.u32 %v219, 4294901760
        %v1820 = vsub.f32 %v219, %v1819
        %v1821 = vand.u32 %v1820, 4294901760
        %1822 = vmatpush1.msra.mxu0 %v1821
        %1823 = vmatprep.subr.mxu0 0.0
        %v1824 = vand.u32 %v220, 4294901760
        %v1825 = vsub.f32 %v220, %v1824
        %v1826 = vand.u32 %v1825, 4294901760
        %1827 = vmatpush1.msra.mxu0 %v1826
        %1828 = vmatprep.subr.mxu0 0.0
        %v1829 = vand.u32 %v221, 4294901760
        %v1830 = vsub.f32 %v221, %v1829
        %v1831 = vand.u32 %v1830, 4294901760
        %1832 = vmatpush1.msra.mxu0 %v1831
        %1833 = vmatprep.subr.mxu0 0.0
        %v1834 = vand.u32 %v222, 4294901760
        %v1835 = vsub.f32 %v222, %v1834
        %v1836 = vand.u32 %v1835, 4294901760
        %1837 = vmatpush1.msra.mxu0 %v1836
        %1838 = vmatprep.subr.mxu0 0.0
        %v1839 = vand.u32 %v223, 4294901760
        %v1840 = vsub.f32 %v223, %v1839
        %v1841 = vand.u32 %v1840, 4294901760
        %1842 = vmatpush1.msra.mxu0 %v1841
        %1843 = vmatprep.subr.mxu0 0.0
        %v1844 = vand.u32 %v224, 4294901760
        %v1845 = vsub.f32 %v224, %v1844
        %v1846 = vand.u32 %v1845, 4294901760
        %1847 = vmatpush1.msra.mxu0 %v1846
        %1848 = vmatprep.subr.mxu0 0.0
        %v1849 = vand.u32 %v225, 4294901760
        %v1850 = vsub.f32 %v225, %v1849
        %v1851 = vand.u32 %v1850, 4294901760
        %1852 = vmatpush1.msra.mxu0 %v1851
        %1853 = vmatprep.subr.mxu0 0.0
        %v1854 = vand.u32 %v226, 4294901760
        %v1855 = vsub.f32 %v226, %v1854
        %v1856 = vand.u32 %v1855, 4294901760
        %1857 = vmatpush1.msra.mxu0 %v1856
        %1858 = vmatprep.subr.mxu0 0.0
        %v1859 = vand.u32 %v227, 4294901760
        %v1860 = vsub.f32 %v227, %v1859
        %v1861 = vand.u32 %v1860, 4294901760
        %1862 = vmatpush1.msra.mxu0 %v1861
        %1863 = vmatprep.subr.mxu0 0.0
        %v1864 = vand.u32 %v228, 4294901760
        %v1865 = vsub.f32 %v228, %v1864
        %v1866 = vand.u32 %v1865, 4294901760
        %1867 = vmatpush1.msra.mxu0 %v1866
        %1868 = vmatprep.subr.mxu0 0.0
        %v1869 = vand.u32 %v229, 4294901760
        %v1870 = vsub.f32 %v229, %v1869
        %v1871 = vand.u32 %v1870, 4294901760
        %1872 = vmatpush1.msra.mxu0 %v1871
        %1873 = vmatprep.subr.mxu0 0.0
        %1874 = vmatpush1.msra.mxu0 0.0
        %1875 = vmatprep.subr.mxu0 0.0
        %1876 = vmatpush1.msra.mxu0 0.0
        %1877 = vmatprep.subr.mxu0 0.0
        %1878 = vmatpush1.msra.mxu0 0.0
        %1879 = vmatprep.subr.mxu0 0.0
        %1880 = vmatpush1.msra.mxu0 0.0
        %1881 = vmatprep.subr.mxu0 0.0
        %1882 = vmatpush1.msra.mxu0 0.0
        %1883 = vmatprep.subr.mxu0 0.0
        %1884 = vmatpush1.msra.mxu0 0.0
        %1885 = vmatprep.subr.mxu0 0.0
        %1886 = vmatpush1.msra.mxu0 0.0
        %1887 = vmatprep.subr.mxu0 0.0
        %1888 = vmatpush1.msra.mxu0 0.0
        %1889 = vmatprep.subr.mxu0 0.0
        %1890 = vmatpush1.msra.mxu0 0.0
        %1891 = vmatprep.subr.mxu0 0.0
        %1892 = vmatpush1.msra.mxu0 0.0
        %1893 = vmatprep.subr.mxu0 0.0
        %1894 = vmatpush1.msra.mxu0 0.0
        %1895 = vmatprep.subr.mxu0 0.0
        %1896 = vmatpush1.msra.mxu0 0.0
        %1897 = vmatprep.subr.mxu0 0.0
        %1898 = vmatpush1.msra.mxu0 0.0
        %1899 = vmatprep.subr.mxu0 0.0
        %1900 = vmatpush1.msra.mxu0 0.0
        %1901 = vmatprep.subr.mxu0 0.0
        %1902 = vmatpush1.msra.mxu0 0.0
        %1903 = vmatprep.subr.mxu0 0.0
        %1904 = vmatpush1.msra.mxu0 0.0
        %1905 = vmatprep.mubr.f32.mxu0 0.0
        %v1906 = vand.u32 %v877, 4294901760
        %1907 = vmatmul.mubr.f32.gmra.mrb[0].mxu0 %v1906
        %v1908 = vpop.f32.mrb[0].mxu0
        %v1909 = vadd.f32 %v1670, %v1908
        %v1910 = vpop.f32.mrb[0].mxu0
        %1911 = vmatprep.mubr.f32.mxu0 0.0
        %v1912 = vand.u32 %v878, 4294901760
        %1913 = vmatmul.mubr.f32.gmra.mrb[0].mxu0 %v1912
        %v1914 = vpop.f32.mrb[0].mxu0
        %v1915 = vadd.f32 %v1678, %v1914
        %v1916 = vpop.f32.mrb[0].mxu0
        %1917 = vmatprep.mubr.f32.mxu0 0.0
        %v1918 = vand.u32 %v879, 4294901760
        %1919 = vmatmul.mubr.f32.gmra.mrb[0].mxu0 %v1918
        %v1920 = vpop.f32.mrb[0].mxu0
        %v1921 = vadd.f32 %v1686, %v1920
        %v1922 = vpop.f32.mrb[0].mxu0
        %1923 = vmatprep.mubr.f32.mxu0 0.0
        %v1924 = vand.u32 %v880, 4294901760
        %1925 = vmatmul.mubr.f32.gmra.mrb[0].mxu0 %v1924
        %v1926 = vpop.f32.mrb[0].mxu0
        %v1927 = vadd.f32 %v1694, %v1926
        %v1928 = vpop.f32.mrb[0].mxu0
        %1929 = vmatprep.mubr.f32.mxu0 0.0
        %v1930 = vand.u32 %v881, 4294901760
        %1931 = vmatmul.mubr.f32.gmra.mrb[0].mxu0 %v1930
        %v1932 = vpop.f32.mrb[0].mxu0
        %v1933 = vadd.f32 %v1702, %v1932
        %v1934 = vpop.f32.mrb[0].mxu0
        %1935 = vmatprep.mubr.f32.mxu0 0.0
        %v1936 = vand.u32 %v882, 4294901760
        %1937 = vmatmul.mubr.f32.gmra.mrb[0].mxu0 %v1936
        %v1938 = vpop.f32.mrb[0].mxu0
        %v1939 = vadd.f32 %v1710, %v1938
        %v1940 = vpop.f32.mrb[0].mxu0
        %1941 = vmatprep.mubr.f32.mxu0 0.0
        %v1942 = vand.u32 %v883, 4294901760
        %1943 = vmatmul.mubr.f32.gmra.mrb[0].mxu0 %v1942
        %v1944 = vpop.f32.mrb[0].mxu0
        %v1945 = vadd.f32 %v1718, %v1944
        %v1946 = vpop.f32.mrb[0].mxu0
        %1947 = vmatprep.mubr.f32.mxu0 0.0
        %v1948 = vand.u32 %v884, 4294901760
        %1949 = vmatmul.mubr.f32.gmra.mrb[0].mxu0 %v1948
        %v1950 = vpop.f32.mrb[0].mxu0
        %v1951 = vadd.f32 %v1726, %v1950
        %v1952 = vpop.f32.mrb[0].mxu0
        %1953 = vmatprep.mubr.f32.mxu0 0.0
        %v1954 = vand.u32 %v885, 4294901760
        %1955 = vmatmul.mubr.f32.gmra.mrb[0].mxu0 %v1954
        %v1956 = vpop.f32.mrb[0].mxu0
        %v1957 = vadd.f32 %v1734, %v1956
        %v1958 = vpop.f32.mrb[0].mxu0
        %1959 = vmatprep.mubr.f32.mxu0 0.0
        %v1960 = vand.u32 %v886, 4294901760
        %1961 = vmatmul.mubr.f32.gmra.mrb[0].mxu0 %v1960
        %v1962 = vpop.f32.mrb[0].mxu0
        %v1963 = vadd.f32 %v1742, %v1962
        %v1964 = vpop.f32.mrb[0].mxu0
        %1965 = vmatprep.mubr.f32.mxu0 0.0
        %v1966 = vand.u32 %v887, 4294901760
        %1967 = vmatmul.mubr.f32.gmra.mrb[0].mxu0 %v1966
        %v1968 = vpop.f32.mrb[0].mxu0
        %v1969 = vadd.f32 %v1750, %v1968
        %v1970 = vpop.f32.mrb[0].mxu0
        %1971 = vmatprep.mubr.f32.mxu0 0.0
        %v1972 = vand.u32 %v888, 4294901760
        %1973 = vmatmul.mubr.f32.gmra.mrb[0].mxu0 %v1972
        %v1974 = vpop.f32.mrb[0].mxu0
        %v1975 = vadd.f32 %v1758, %v1974
        %v1976 = vpop.f32.mrb[0].mxu0
        %1977 = vmatprep.mubr.f32.mxu0 0.0
        %v1978 = vand.u32 %v889, 4294901760
        %1979 = vmatmul.mubr.f32.gmra.mrb[0].mxu0 %v1978
        %v1980 = vpop.f32.mrb[0].mxu0
        %v1981 = vadd.f32 %v1766, %v1980
        %v1982 = vpop.f32.mrb[0].mxu0
        %1983 = vmatprep.mubr.f32.mxu0 0.0
        %v1984 = vand.u32 %v890, 4294901760
        %1985 = vmatmul.mubr.f32.gmra.mrb[0].mxu0 %v1984
        %v1986 = vpop.f32.mrb[0].mxu0
        %v1987 = vadd.f32 %v1774, %v1986
        %v1988 = vpop.f32.mrb[0].mxu0
        %1989 = vmatprep.mubr.f32.mxu0 0.0
        %v1990 = vand.u32 %v891, 4294901760
        %1991 = vmatmul.mubr.f32.gmra.mrb[0].mxu0 %v1990
        %v1992 = vpop.f32.mrb[0].mxu0
        %v1993 = vadd.f32 %v1782, %v1992
        %v1994 = vpop.f32.mrb[0].mxu0
        %1995 = vmatprep.mubr.f32.mxu0 0.0
        %v1996 = vand.u32 %v892, 4294901760
        %1997 = vmatmul.mubr.f32.gmra.mrb[0].mxu0 %v1996
        %v1998 = vpop.f32.mrb[0].mxu0
        %v1999 = vadd.f32 %v1790, %v1998
        %v2000 = vpop.f32.mrb[0].mxu0
        %2001 = vdwg.mxu0
        %2002 = vmatprep.subr.mxu0 0.0
        %v2003 = vand.u32 %v214, 4294901760
        %2004 = vmatpush1.msra.mxu0 %v2003
        %2005 = vmatprep.subr.mxu0 0.0
        %v2006 = vand.u32 %v215, 4294901760
        %2007 = vmatpush1.msra.mxu0 %v2006
        %2008 = vmatprep.subr.mxu0 0.0
        %v2009 = vand.u32 %v216, 4294901760
        %2010 = vmatpush1.msra.mxu0 %v2009
        %2011 = vmatprep.subr.mxu0 0.0
        %v2012 = vand.u32 %v217, 4294901760
        %2013 = vmatpush1.msra.mxu0 %v2012
        %2014 = vmatprep.subr.mxu0 0.0
        %v2015 = vand.u32 %v218, 4294901760
        %2016 = vmatpush1.msra.mxu0 %v2015
        %2017 = vmatprep.subr.mxu0 0.0
        %v2018 = vand.u32 %v219, 4294901760
        %2019 = vmatpush1.msra.mxu0 %v2018
        %2020 = vmatprep.subr.mxu0 0.0
        %v2021 = vand.u32 %v220, 4294901760
        %2022 = vmatpush1.msra.mxu0 %v2021
        %2023 = vmatprep.subr.mxu0 0.0
        %v2024 = vand.u32 %v221, 4294901760
        %2025 = vmatpush1.msra.mxu0 %v2024
        %2026 = vmatprep.subr.mxu0 0.0
        %v2027 = vand.u32 %v222, 4294901760
        %2028 = vmatpush1.msra.mxu0 %v2027
        %2029 = vmatprep.subr.mxu0 0.0
        %v2030 = vand.u32 %v223, 4294901760
        %2031 = vmatpush1.msra.mxu0 %v2030
        %2032 = vmatprep.subr.mxu0 0.0
        %v2033 = vand.u32 %v224, 4294901760
        %2034 = vmatpush1.msra.mxu0 %v2033
        %2035 = vmatprep.subr.mxu0 0.0
        %v2036 = vand.u32 %v225, 4294901760
        %2037 = vmatpush1.msra.mxu0 %v2036
        %2038 = vmatprep.subr.mxu0 0.0
        %v2039 = vand.u32 %v226, 4294901760
        %2040 = vmatpush1.msra.mxu0 %v2039
        %2041 = vmatprep.subr.mxu0 0.0
        %v2042 = vand.u32 %v227, 4294901760
        %2043 = vmatpush1.msra.mxu0 %v2042
        %2044 = vmatprep.subr.mxu0 0.0
        %v2045 = vand.u32 %v228, 4294901760
        %2046 = vmatpush1.msra.mxu0 %v2045
        %2047 = vmatprep.subr.mxu0 0.0
        %v2048 = vand.u32 %v229, 4294901760
        %2049 = vmatpush1.msra.mxu0 %v2048
        %2050 = vmatprep.subr.mxu0 0.0
        %2051 = vmatpush1.msra.mxu0 0.0
        %2052 = vmatprep.subr.mxu0 0.0
        %2053 = vmatpush1.msra.mxu0 0.0
        %2054 = vmatprep.subr.mxu0 0.0
        %2055 = vmatpush1.msra.mxu0 0.0
        %2056 = vmatprep.subr.mxu0 0.0
        %2057 = vmatpush1.msra.mxu0 0.0
        %2058 = vmatprep.subr.mxu0 0.0
        %2059 = vmatpush1.msra.mxu0 0.0
        %2060 = vmatprep.subr.mxu0 0.0
        %2061 = vmatpush1.msra.mxu0 0.0
        %2062 = vmatprep.subr.mxu0 0.0
        %2063 = vmatpush1.msra.mxu0 0.0
        %2064 = vmatprep.subr.mxu0 0.0
        %2065 = vmatpush1.msra.mxu0 0.0
        %2066 = vmatprep.subr.mxu0 0.0
        %2067 = vmatpush1.msra.mxu0 0.0
        %2068 = vmatprep.subr.mxu0 0.0
        %2069 = vmatpush1.msra.mxu0 0.0
        %2070 = vmatprep.subr.mxu0 0.0
        %2071 = vmatpush1.msra.mxu0 0.0
        %2072 = vmatprep.subr.mxu0 0.0
        %2073 = vmatpush1.msra.mxu0 0.0
        %2074 = vmatprep.subr.mxu0 0.0
        %2075 = vmatpush1.msra.mxu0 0.0
        %2076 = vmatprep.subr.mxu0 0.0
        %2077 = vmatpush1.msra.mxu0 0.0
        %2078 = vmatprep.subr.mxu0 0.0
        %2079 = vmatpush1.msra.mxu0 0.0
        %2080 = vmatprep.subr.mxu0 0.0
        %2081 = vmatpush1.msra.mxu0 0.0
        %2082 = vmatprep.mubr.f32.mxu0 0.0
        %v2083 = vand.u32 %v877, 4294901760
        %2084 = vmatmul.mubr.f32.gmra.mrb[0].mxu0 %v2083
        %v2085 = vpop.f32.mrb[0].mxu0
        %v2086 = vadd.f32 %v1909, %v2085
        %v2087 = vpop.f32.mrb[0].mxu0
        %2088 = vmatprep.mubr.f32.mxu0 0.0
        %v2089 = vand.u32 %v878, 4294901760
        %2090 = vmatmul.mubr.f32.gmra.mrb[0].mxu0 %v2089
        %v2091 = vpop.f32.mrb[0].mxu0
        %v2092 = vadd.f32 %v1915, %v2091
        %v2093 = vpop.f32.mrb[0].mxu0
        %2094 = vmatprep.mubr.f32.mxu0 0.0
        %v2095 = vand.u32 %v879, 4294901760
        %2096 = vmatmul.mubr.f32.gmra.mrb[0].mxu0 %v2095
        %v2097 = vpop.f32.mrb[0].mxu0
        %v2098 = vadd.f32 %v1921, %v2097
        %v2099 = vpop.f32.mrb[0].mxu0
        %2100 = vmatprep.mubr.f32.mxu0 0.0
        %v2101 = vand.u32 %v880, 4294901760
        %2102 = vmatmul.mubr.f32.gmra.mrb[0].mxu0 %v2101
        %v2103 = vpop.f32.mrb[0].mxu0
        %v2104 = vadd.f32 %v1927, %v2103
        %v2105 = vpop.f32.mrb[0].mxu0
        %2106 = vmatprep.mubr.f32.mxu0 0.0
        %v2107 = vand.u32 %v881, 4294901760
        %2108 = vmatmul.mubr.f32.gmra.mrb[0].mxu0 %v2107
        %v2109 = vpop.f32.mrb[0].mxu0
        %v2110 = vadd.f32 %v1933, %v2109
        %v2111 = vpop.f32.mrb[0].mxu0
        %2112 = vmatprep.mubr.f32.mxu0 0.0
        %v2113 = vand.u32 %v882, 4294901760
        %2114 = vmatmul.mubr.f32.gmra.mrb[0].mxu0 %v2113
        %v2115 = vpop.f32.mrb[0].mxu0
        %v2116 = vadd.f32 %v1939, %v2115
        %v2117 = vpop.f32.mrb[0].mxu0
        %2118 = vmatprep.mubr.f32.mxu0 0.0
        %v2119 = vand.u32 %v883, 4294901760
        %2120 = vmatmul.mubr.f32.gmra.mrb[0].mxu0 %v2119
        %v2121 = vpop.f32.mrb[0].mxu0
        %v2122 = vadd.f32 %v1945, %v2121
        %v2123 = vpop.f32.mrb[0].mxu0
        %2124 = vmatprep.mubr.f32.mxu0 0.0
        %v2125 = vand.u32 %v884, 4294901760
        %2126 = vmatmul.mubr.f32.gmra.mrb[0].mxu0 %v2125
        %v2127 = vpop.f32.mrb[0].mxu0
        %v2128 = vadd.f32 %v1951, %v2127
        %v2129 = vpop.f32.mrb[0].mxu0
        %2130 = vmatprep.mubr.f32.mxu0 0.0
        %v2131 = vand.u32 %v885, 4294901760
        %2132 = vmatmul.mubr.f32.gmra.mrb[0].mxu0 %v2131
        %v2133 = vpop.f32.mrb[0].mxu0
        %v2134 = vadd.f32 %v1957, %v2133
        %v2135 = vpop.f32.mrb[0].mxu0
        %2136 = vmatprep.mubr.f32.mxu0 0.0
        %v2137 = vand.u32 %v886, 4294901760
        %2138 = vmatmul.mubr.f32.gmra.mrb[0].mxu0 %v2137
        %v2139 = vpop.f32.mrb[0].mxu0
        %v2140 = vadd.f32 %v1963, %v2139
        %v2141 = vpop.f32.mrb[0].mxu0
        %2142 = vmatprep.mubr.f32.mxu0 0.0
        %v2143 = vand.u32 %v887, 4294901760
        %2144 = vmatmul.mubr.f32.gmra.mrb[0].mxu0 %v2143
        %v2145 = vpop.f32.mrb[0].mxu0
        %v2146 = vadd.f32 %v1969, %v2145
        %v2147 = vpop.f32.mrb[0].mxu0
        %2148 = vmatprep.mubr.f32.mxu0 0.0
        %v2149 = vand.u32 %v888, 4294901760
        %2150 = vmatmul.mubr.f32.gmra.mrb[0].mxu0 %v2149
        %v2151 = vpop.f32.mrb[0].mxu0
        %v2152 = vadd.f32 %v1975, %v2151
        %v2153 = vpop.f32.mrb[0].mxu0
        %2154 = vmatprep.mubr.f32.mxu0 0.0
        %v2155 = vand.u32 %v889, 4294901760
        %2156 = vmatmul.mubr.f32.gmra.mrb[0].mxu0 %v2155
        %v2157 = vpop.f32.mrb[0].mxu0
        %v2158 = vadd.f32 %v1981, %v2157
        %v2159 = vpop.f32.mrb[0].mxu0
        %2160 = vmatprep.mubr.f32.mxu0 0.0
        %v2161 = vand.u32 %v890, 4294901760
        %2162 = vmatmul.mubr.f32.gmra.mrb[0].mxu0 %v2161
        %v2163 = vpop.f32.mrb[0].mxu0
        %v2164 = vadd.f32 %v1987, %v2163
        %v2165 = vpop.f32.mrb[0].mxu0
        %2166 = vmatprep.mubr.f32.mxu0 0.0
        %v2167 = vand.u32 %v891, 4294901760
        %2168 = vmatmul.mubr.f32.gmra.mrb[0].mxu0 %v2167
        %v2169 = vpop.f32.mrb[0].mxu0
        %v2170 = vadd.f32 %v1993, %v2169
        %v2171 = vpop.f32.mrb[0].mxu0
        %2172 = vmatprep.mubr.f32.mxu0 0.0
        %v2173 = vand.u32 %v892, 4294901760
        %2174 = vmatmul.mubr.f32.gmra.mrb[0].mxu0 %v2173
        %v2175 = vpop.f32.mrb[0].mxu0
        %v2176 = vadd.f32 %v1999, %v2175
        %v2177 = vpop.f32.mrb[0].mxu0
        %2178 = vdwg.mxu0
        %v2179 = vld [vmem:[%s189] sm:$0xff]
        %v2180 = vld [vmem:[%s189 + $0x8] sm:$0xff]
        %v2181 = vld [vmem:[%s189 + $0x10] sm:$0xff]
        %v2182 = vld [vmem:[%s189 + $0x18] sm:$0xff]
        %v2183 = vld [vmem:[%s189 + $0x20] sm:$0xff]
        %v2184 = vld [vmem:[%s189 + $0x28] sm:$0xff]
        %v2185 = vld [vmem:[%s189 + $0x30] sm:$0xff]
        %v2186 = vld [vmem:[%s189 + $0x38] sm:$0xff]
        %v2187 = vld [vmem:[%s189 + $0x40] sm:$0xff]
        %v2188 = vld [vmem:[%s189 + $0x48] sm:$0xff]
        %v2189 = vld [vmem:[%s189 + $0x50] sm:$0xff]
        %v2190 = vld [vmem:[%s189 + $0x58] sm:$0xff]
        %v2191 = vld [vmem:[%s189 + $0x60] sm:$0xff]
        %v2192 = vld [vmem:[%s189 + $0x68] sm:$0xff]
        %v2193 = vld [vmem:[%s189 + $0x70] sm:$0xff]
        %v2194 = vld [vmem:[%s189 + $0x78] sm:$0xff]
        %v2195 = vadd.f32 %v2179, %v2086
        %v2196 = vadd.f32 %v2180, %v2092
        %v2197 = vadd.f32 %v2181, %v2098
        %v2198 = vadd.f32 %v2182, %v2104
        %v2199 = vadd.f32 %v2183, %v2110
        %v2200 = vadd.f32 %v2184, %v2116
        %v2201 = vadd.f32 %v2185, %v2122
        %v2202 = vadd.f32 %v2186, %v2128
        %v2203 = vadd.f32 %v2187, %v2134
        %v2204 = vadd.f32 %v2188, %v2140
        %v2205 = vadd.f32 %v2189, %v2146
        %v2206 = vadd.f32 %v2190, %v2152
        %v2207 = vadd.f32 %v2191, %v2158
        %v2208 = vadd.f32 %v2192, %v2164
        %v2209 = vadd.f32 %v2193, %v2170
        %v2210 = vadd.f32 %v2194, %v2176
        %2211 = vst [vmem:[%s189] sm:$0xff] %v2195
        %2212 = vst [vmem:[%s189 + $0x8] sm:$0xff] %v2196
        %2213 = vst [vmem:[%s189 + $0x10] sm:$0xff] %v2197
        %2214 = vst [vmem:[%s189 + $0x18] sm:$0xff] %v2198
        %2215 = vst [vmem:[%s189 + $0x20] sm:$0xff] %v2199
        %2216 = vst [vmem:[%s189 + $0x28] sm:$0xff] %v2200
        %2217 = vst [vmem:[%s189 + $0x30] sm:$0xff] %v2201
        %2218 = vst [vmem:[%s189 + $0x38] sm:$0xff] %v2202
        %2219 = vst [vmem:[%s189 + $0x40] sm:$0xff] %v2203
        %2220 = vst [vmem:[%s189 + $0x48] sm:$0xff] %v2204
        %2221 = vst [vmem:[%s189 + $0x50] sm:$0xff] %v2205
        %2222 = vst [vmem:[%s189 + $0x58] sm:$0xff] %v2206
        %2223 = vst [vmem:[%s189 + $0x60] sm:$0xff] %v2207
        %2224 = vst [vmem:[%s189 + $0x68] sm:$0xff] %v2208
        %2225 = vst [vmem:[%s189 + $0x70] sm:$0xff] %v2209
        %2226 = vst [vmem:[%s189 + $0x78] sm:$0xff] %v2210
        %s2227 = sand.u32 %s73, 1
        %s2228 = scalar_lea.sflag [#allocation4], %s2227
        %s2229 = sand.u32 %s73, 1
        %s2230 = scalar_lea.vmem [#allocation5], %s2229
        %s2231 = sand.u32 %s99, 1
        %s2232 = scalar_lea.sflag [#allocation7], %s2231
        %s2233 = sand.u32 %s99, 1
        %s2234 = smul.addr %s2233, 128
        %s2235 = scalar_lea.vmem [#allocation6], %s2234
        // Predicated region
        $region33: #{tpu_custom_call.1} parent=23 // pred_check
          %p2236 = pneg %p83
        $region34: #{tpu_custom_call.1} parent=23 // pred_check_branch
          %2238 = sbr.rel (%p2236) target = $region36
        $region35: #{tpu_custom_call.1} parent=23 // pred_region
          %s2240 = ssub.s32 16, 16
          %2241 = vsyncadd %s2228, %s2240
          %s2242 = smul.addr %s27, 16
          %s2243 = scalar_lea.hbm %s1, %s2242
          %s2245 = sshll.u32 %s2230, 4
          %s2246 = int_to_ptr.vmem [resolvable:$true] %s2245
          %2248 = dma.vmem_to_hbm [thread:$0]  %s2246, 16, %s2243, %s2228
        $region36: #{tpu_custom_call.1} parent=23 // pred_fallthru
          _
        // Predicated region
        $region37: #{tpu_custom_call.1} parent=23 // pred_check
          %p2249 = pneg %p109
        $region38: #{tpu_custom_call.1} parent=23 // pred_check_branch
          %2251 = sbr.rel (%p2249) target = $region40
        $region39: #{tpu_custom_call.1} parent=23 // pred_region
          %s2253 = ssub.s32 2048, 2048
          %2254 = vsyncadd %s2232, %s2253
          %s2255 = smul.addr %s27, 16
          %s2256 = smul.addr %s2255, 128
          %s2257 = scalar_lea.hbm %s2, %s2256
          %s2258 = sshll.u32 %s2235, 4
          %s2259 = int_to_ptr.vmem [resolvable:$true] %s2258
          %2264 = dma.vmem_to_hbm [thread:$0]  %s2259, 2048, %s2257, %s2232, 128, 128, 8
        $region40: #{tpu_custom_call.1} parent=23 // pred_fallthru
          _
      $region24: #{tpu_custom_call.1} parent=5 // pred_fallthru
        _
      %p2265 = scmp.le.s32.totalorder 2, %s18
      // Predicated region
      $region41: #{tpu_custom_call.1} parent=5 // pred_check
        %p2266 = pneg %p2265
      $region42: #{tpu_custom_call.1} parent=5 // pred_check_branch
        %2268 = sbr.rel (%p2266) target = $region44
      $region43: #{tpu_custom_call.1} parent=5 // pred_region
        %s2269 = ssub.s32 %s18, 2
        // Predicated region
        $region45: #{tpu_custom_call.1} parent=43 // pred_check
          %p2270 = pneg %p89
        $region46: #{tpu_custom_call.1} parent=43 // pred_check_branch
          %2272 = sbr.rel (%p2270) target = $region48
        $region47: #{tpu_custom_call.1} parent=43 // pred_region
          %s2273 = sand.u32 %s74, 1
          %s2274 = scalar_lea.sflag [#allocation4], %s2273
          %s2275 = sand.u32 %s74, 1
          %s2276 = scalar_lea.vmem [#allocation5], %s2275
          %2277 = dma.done %s2274, 16
        $region48: #{tpu_custom_call.1} parent=43 // pred_fallthru
          _
        // Predicated region
        $region49: #{tpu_custom_call.1} parent=43 // pred_check
          %p2278 = pneg %p115
        $region50: #{tpu_custom_call.1} parent=43 // pred_check_branch
          %2280 = sbr.rel (%p2278) target = $region52
        $region51: #{tpu_custom_call.1} parent=43 // pred_region
          %s2281 = sand.u32 %s100, 1
          %s2282 = scalar_lea.sflag [#allocation7], %s2281
          %s2283 = sand.u32 %s100, 1
          %s2284 = smul.addr %s2283, 128
          %s2285 = scalar_lea.vmem [#allocation6], %s2284
          %2286 = dma.done %s2282, 2048
        $region52: #{tpu_custom_call.1} parent=43 // pred_fallthru
          _
      $region44: #{tpu_custom_call.1} parent=5 // pred_fallthru
        _
    $region6: #{tpu_custom_call.1} parent=1 // loop_footer
      %s22 = sadd.s32 1, %s18
    $region7: #{tpu_custom_call.1} parent=1 // loop_footer_branch
      %17 = sbr.rel target = $region3
    $region8: #{tpu_custom_call.1} parent=1 // loop_exit
      _
    %2287 = vsyncpa [#allocation3], 1
    %s2288 = scalar_lea.sflag [#allocation3], 1
    %2289 = vsyncpa %s2288, 1
    %2290 = vsyncpa [#allocation4], 1
    %s2291 = scalar_lea.sflag [#allocation4], 1
    %2292 = vsyncpa %s2291, 1
    %2293 = vsyncpa [#allocation7], 1
    %s2294 = scalar_lea.sflag [#allocation7], 1
    %2295 = vsyncpa %s2294, 1

</llo_original>
